<compile_context>
chip_gen: v5e
topology: v5e:2x2
jax: 0.10.0
libtpu: 0.0.40
codegen_flags: <defaults>
</compile_context>

<pallas_src>
import math
from functools import partial

import jax
import jax.numpy as jnp
from jax import lax
from jax.experimental import pallas as pl
from jax.experimental.pallas import tpu as pltpu

_LN_EPS = 1e-5


def _gelu(x, approx):
    if approx:
        # tanh approximation routes through the EUP slot (frees VALU); ~1e-3
        # numeric delta vs nn.GELU()'s exact erf.
        return jax.nn.gelu(x, approximate=True)
    return 0.5 * x * (1.0 + lax.erf(x * (1.0 / math.sqrt(2.0))))


def _ln_over_sublanes(x, gamma, beta, eps=_LN_EPS):
    # One-pass LayerNorm over axis 0 (channels live on sublanes), per lane:
    # var = E[x^2] - mu^2 -> single pass over the tile, two independent reduces.
    c = x.shape[0]
    inv_c = 1.0 / c
    s1 = jnp.sum(x, axis=0, keepdims=True)
    s2 = jnp.sum(x * x, axis=0, keepdims=True)
    mu = s1 * inv_c
    var = jnp.maximum(s2 * inv_c - mu * mu, 0.0)
    return (x - mu) * lax.rsqrt(var + eps) * gamma + beta


# ---------------------------------------------------------------------------
# Fused kernel; per (batch, spatial-tile) grid step.
#   x_ref   : (1, dim, TP)       input tile (channels on sublanes, spatial on lanes)
#   wsp_ref : (TP, 1)            slice of Linear(im_size -> 1) weight column
#   w1_ref  : (dim_out, dim)     conv1 weight (x dtype)
#   w3_ref  : (dim_out, dim_out) conv3 weight (f32, used only at finalize)
#   w2_ref  : (dim_out, dim)     conv2 weight (f32, used only at finalize)
#   pA_ref  : (dim_out, 5)       packed [conv1_b, ln_g, ln_b, conv3_b, conv2_b]
#   pSP_ref : (dim, 3)           packed [lnsp_g, lnsp_b, convsp_b (broadcast)]
#   o_ref   : (1, 2*dim_out, 1)  output block (same block across all spatial tiles)
#   acc_feat: VMEM (dim_out, 1)  running lane-sum of post-GELU conv1 branch
#   acc_sp  : VMEM (dim, 1)      running weighted spatial sum of branch B
# ---------------------------------------------------------------------------
def _spatial_att_kernel(x_ref, wsp_ref, w1_ref, w3_ref, w2_ref, pA_ref, pSP_ref,
                        o_ref, acc_feat, acc_sp, *,
                        inv_hw, valid_hw, tile, needs_mask, approx_gelu):
    t = pl.program_id(1)
    nt = pl.num_programs(1)

    @pl.when(t == 0)
    def _init():
        acc_feat[...] = jnp.zeros_like(acc_feat)
        acc_sp[...] = jnp.zeros_like(acc_sp)

    x = x_ref[0]                                                     # (dim, TP)

    # --- branch A partial: conv1 -> LayerNorm(channels) -> GELU, lane-sum.
    # conv3 is hoisted to the finalize step (mean pool is linear).
    y = jnp.dot(w1_ref[...], x, preferred_element_type=jnp.float32) + pA_ref[:, 0:1]
    y = _gelu(_ln_over_sublanes(y, pA_ref[:, 1:2], pA_ref[:, 2:3]), approx_gelu)
    if needs_mask:
        # Only the last tile can contain padded lanes (bias/LN/GELU of a zero
        # column is nonzero, so it must be excluded from the pooled sum).
        lane = lax.broadcasted_iota(jnp.int32, (1, tile), 1)
        valid = valid_hw - t * tile
        y = y * (lane < valid).astype(y.dtype)
    acc_feat[...] += jnp.sum(y, axis=1, keepdims=True)               # (dim_out, 1)

    # --- branch B partial: Linear(im_size->1) as an MXU matvec, f32 accumulate.
    # (x and wsp are zero in padded lanes, so this is exact without masking.)
    acc_sp[...] += jnp.dot(x, wsp_ref[...], preferred_element_type=jnp.float32)

    @pl.when(t == nt - 1)
    def _finalize():
        do = acc_feat.shape[0]

        # branch A epilogue: conv3 applied once to the pooled mean.
        feat_mean = acc_feat[...] * inv_hw                           # (dim_out, 1)
        feat_a = (jnp.dot(w3_ref[...], feat_mean,
                          preferred_element_type=jnp.float32) + pA_ref[:, 3:4])

        # branch B epilogue: bias -> LayerNorm(dim) -> GELU -> conv2.
        sp = acc_sp[...] + pSP_ref[:, 2:3]                           # (dim, 1)
        sp = _gelu(_ln_over_sublanes(sp, pSP_ref[:, 0:1], pSP_ref[:, 1:2]),
                   approx_gelu)
        feat_b = (jnp.dot(w2_ref[...], sp,
                          preferred_element_type=jnp.float32) + pA_ref[:, 4:5])

        # Write the two halves directly (no concat copy).
        o_ref[:, 0:do, :] = feat_a[None].astype(o_ref.dtype)
        o_ref[:, do:2 * do, :] = feat_b[None].astype(o_ref.dtype)


def _pick_spatial_tile(hw, dim, dim_out, x_itemsize, max_tile=2048,
                       vmem_budget=28 * 1024 * 1024):
    """Largest multiple-of-128 tile <= max_tile whose working set fits the budget.

    The tile does NOT need to divide hw: the wrapper pads the spatial axis and
    the kernel masks the padded lanes.
    """
    hw128 = -(-hw // 128) * 128
    tp = min(max_tile, hw128)

    def est(t):
        return (2 * dim * t * x_itemsize          # x double buffer
                + 2 * t * x_itemsize              # convsp weight column double buffer
                + 4 * dim_out * t * 4)            # conv1/LN/GELU f32 temporaries

    while tp > 128 and est(tp) > vmem_budget:
        tp -= 128
    return max(tp, 128)


def spatial_att_forward(x_nchw, params, spatial_tile=None, approx_gelu=False):
    n, dim, h, w = x_nchw.shape
    hw = h * w
    dim_out = params['conv1_w'].shape[0]
    assert params['convsp_w'].shape[-1] == hw, "im_size must equal h*w"

    # Free reshape: stays in the native NCHW layout (channels -> sublanes,
    # flattened spatial -> lanes).  No transpose.
    x3 = x_nchw.reshape(n, dim, hw)
    xdt = x3.dtype                       # stream x in its native dtype (bf16 OK)
    itemsize = jnp.dtype(xdt).itemsize

    tp = (spatial_tile if spatial_tile is not None
          else _pick_spatial_tile(hw, dim, dim_out, itemsize))
    assert tp % 128 == 0, "spatial tile must be a multiple of 128 lanes"
    n_t = -(-hw // tp)
    hw_pad = n_t * tp
    needs_mask = hw_pad != hw
    if needs_mask:
        x3 = jnp.pad(x3, ((0, 0), (0, 0), (0, hw_pad - hw)))

    # Streaming weights follow x's dtype (MXU bf16 path); epilogue weights f32.
    w1 = params['conv1_w'].reshape(dim_out, dim).astype(xdt)
    w3 = params['conv3_w'].reshape(dim_out, dim_out).astype(jnp.float32)
    w2 = params['conv2_w'].reshape(dim_out, dim).astype(jnp.float32)
    wsp = params['convsp_w'].reshape(hw, 1).astype(xdt)
    if needs_mask:
        wsp = jnp.pad(wsp, ((0, hw_pad - hw), (0, 0)))

    # Pack the small per-channel params to cut padded VMEM blocks / DMA count.
    packA = jnp.stack(
        [params['conv1_b'], params['ln_g'], params['ln_b'],
         params['conv3_b'], params['conv2_b']], axis=1).astype(jnp.float32)
    bsp_vec = jnp.broadcast_to(params['convsp_b'].reshape(1).astype(jnp.float32),
                               (dim,))
    packSP = jnp.stack(
        [params['lnsp_g'].astype(jnp.float32),
         params['lnsp_b'].astype(jnp.float32), bsp_vec], axis=1)     # (dim, 3)

    kernel = partial(_spatial_att_kernel, inv_hw=1.0 / float(hw), valid_hw=hw,
                     tile=tp, needs_mask=needs_mask, approx_gelu=approx_gelu)
    _full = lambda b, t: (0, 0)

    out = pl.pallas_call(
        kernel,
        out_shape=jax.ShapeDtypeStruct((n, 2 * dim_out, 1), jnp.float32),
        grid=(n, n_t),
        in_specs=[
            pl.BlockSpec((1, dim, tp), lambda b, t: (b, 0, t)),   # x tile
            pl.BlockSpec((tp, 1), lambda b, t: (t, 0)),           # convsp weight col
            pl.BlockSpec((dim_out, dim), _full),                  # conv1 W
            pl.BlockSpec((dim_out, dim_out), _full),              # conv3 W
            pl.BlockSpec((dim_out, dim), _full),                  # conv2 W
            pl.BlockSpec((dim_out, 5), _full),                    # packed dim_out params
            pl.BlockSpec((dim, 3), _full),                        # packed dim params
        ],
        out_specs=pl.BlockSpec((1, 2 * dim_out, 1), lambda b, t: (b, 0, 0)),
        scratch_shapes=[
            pltpu.VMEM((dim_out, 1), jnp.float32),                # branch A pool acc
            pltpu.VMEM((dim, 1), jnp.float32),                    # branch B weighted sum
        ],
        compiler_params=pltpu.CompilerParams(
            dimension_semantics=("parallel", "arbitrary"),
            vmem_limit_bytes=48 * 1024 * 1024),
    )(x3, wsp, w1, w3, w2, packA, packSP)

    return out.reshape(n, 2 * dim_out, 1, 1)


# ---------------------------------------------------------------------------
# Pure-JAX reference (independent code path) for validation
# ---------------------------------------------------------------------------
def reference_forward(x, params, eps=_LN_EPS):
    n, dim, h, w = x.shape
    hw = h * w
    dim_out = params['conv1_w'].shape[0]

    def gelu(v):
        return 0.5 * v * (1.0 + lax.erf(v * (1.0 / math.sqrt(2.0))))

    # branch A
    w1 = params['conv1_w'].reshape(dim_out, dim)
    f = jnp.einsum('oc,nchw->nohw', w1, x) + params['conv1_b'][None, :, None, None]
    mu = jnp.mean(f, axis=1, keepdims=True)
    var = jnp.mean((f - mu) ** 2, axis=1, keepdims=True)
    f = ((f - mu) * lax.rsqrt(var + eps) * params['ln_g'][None, :, None, None]
         + params['ln_b'][None, :, None, None])
    f = gelu(f)
    w3 = params['conv3_w'].reshape(dim_out, dim_out)
    f = jnp.einsum('oc,nchw->nohw', w3, f) + params['conv3_b'][None, :, None, None]
    feat_mean = jnp.mean(f.reshape(n, dim_out, hw), axis=2)             # (n, dim_out)

    # branch B
    xs = x.reshape(n, dim, hw)
    sp = jnp.einsum('ncp,p->nc', xs, params['convsp_w'].reshape(hw)) + params['convsp_b'][0]
    mu = jnp.mean(sp, axis=1, keepdims=True)
    var = jnp.mean((sp - mu) ** 2, axis=1, keepdims=True)
    sp = (sp - mu) * lax.rsqrt(var + eps) * params['lnsp_g'][None, :] + params['lnsp_b'][None, :]
    sp = gelu(sp)
    w2 = params['conv2_w'].reshape(dim_out, dim)
    sp = sp @ w2.T + params['conv2_b'][None, :]                         # (n, dim_out)

    out = jnp.concatenate([feat_mean, sp], axis=1)
    return out.reshape(n, 2 * dim_out, 1, 1)


if __name__ == "__main__":
    key = jax.random.PRNGKey(0)
    # h*w = 225 is deliberately NOT a multiple of 128: exercises the
    # pad-to-tile + padded-lane-masking path as well as multi-tile accumulation.
    n, dim, dim_out, h, w = 2, 64, 32, 15, 15
    im_size = h * w
    ks = jax.random.split(key, 10)

    def u(k, shape, scale):
        return jax.random.uniform(k, shape, minval=-scale, maxval=scale).astype(jnp.float32)

    params = {
        'conv1_w': u(ks[0], (dim_out, dim, 1, 1), 1.0 / math.sqrt(dim)),    # Conv2d 1x1
        'conv1_b': u(ks[1], (dim_out,), 1.0 / math.sqrt(dim)),
        'ln_g': jnp.ones((dim_out,), jnp.float32),                          # LayerNorm(dim_out)
        'ln_b': jnp.zeros((dim_out,), jnp.float32),
        'conv3_w': u(ks[2], (dim_out, dim_out, 1, 1), 1.0 / math.sqrt(dim_out)),
        'conv3_b': u(ks[3], (dim_out,), 1.0 / math.sqrt(dim_out)),
        'convsp_w': u(ks[4], (1, im_size), 1.0 / math.sqrt(im_size)),       # Linear(im_size, 1)
        'convsp_b': u(ks[5], (1,), 1.0 / math.sqrt(im_size)),
        'lnsp_g': jnp.ones((dim,), jnp.float32),                            # LayerNorm(dim)
        'lnsp_b': jnp.zeros((dim,), jnp.float32),
        'conv2_w': u(ks[6], (dim_out, dim, 1, 1), 1.0 / math.sqrt(dim)),    # Conv2d 1x1
        'conv2_b': u(ks[7], (dim_out,), 1.0 / math.sqrt(dim)),
    }
    x = jax.random.normal(ks[8], (n, dim, h, w), jnp.float32)
    ref = reference_forward(x, params)

    # 1) f32 streaming, forced 128-lane tiles -> multi-tile accumulation and
    #    padded-lane masking; tight tolerance vs. the independent reference.
    fwd_f32 = jax.jit(partial(spatial_att_forward, spatial_tile=128))
    out_f32 = jax.block_until_ready(fwd_f32(x, params))
    assert out_f32.shape == (n, 2 * dim_out, 1, 1)
    err_f32 = float(jnp.max(jnp.abs(out_f32 - ref)))
    if not bool(jnp.allclose(out_f32, ref, atol=1e-4, rtol=1e-4)):
        raise AssertionError(f"f32 Pallas output mismatch, max abs err = {err_f32}")

    # 2) bf16 streaming (recommended deployment path) with the automatic tile
    #    picker; compared against a reference on identically bf16-rounded inputs.
    x_bf16 = x.astype(jnp.bfloat16)
    out_bf16 = jax.block_until_ready(jax.jit(spatial_att_forward)(x_bf16, params))
    params_rt = dict(params)
    params_rt['conv1_w'] = params['conv1_w'].astype(jnp.bfloat16).astype(jnp.float32)
    params_rt['convsp_w'] = params['convsp_w'].astype(jnp.bfloat16).astype(jnp.float32)
    ref_bf16 = reference_forward(x_bf16.astype(jnp.float32), params_rt)
    err_bf16 = float(jnp.max(jnp.abs(out_bf16 - ref_bf16)))
    if not bool(jnp.allclose(out_bf16, ref_bf16, atol=1e-2, rtol=1e-2)):
        raise AssertionError(f"bf16 Pallas output mismatch, max abs err = {err_bf16}")

    print("KERNEL_OK")
</pallas_src>

<mosaic_0001>
module attributes {stable_mosaic.version = 11 : i64} {
  func.func @_spatial_att_kernel(%arg0: i32, %arg1: i32, %arg2: memref<1x64x128xf32, #tpu.memory_space<vmem>>, %arg3: memref<128x1xf32, #tpu.memory_space<vmem>>, %arg4: memref<32x64xf32, #tpu.memory_space<vmem>>, %arg5: memref<32x32xf32, #tpu.memory_space<vmem>>, %arg6: memref<32x64xf32, #tpu.memory_space<vmem>>, %arg7: memref<32x5xf32, #tpu.memory_space<vmem>>, %arg8: memref<64x3xf32, #tpu.memory_space<vmem>>, %arg9: memref<1x64x1xf32, #tpu.memory_space<vmem>>, %arg10: memref<32x1xf32, #tpu.memory_space<vmem>>, %arg11: memref<64x1xf32, #tpu.memory_space<vmem>>) attributes {dimension_semantics = [#tpu.dimension_semantics<parallel>, #tpu.dimension_semantics<arbitrary>], iteration_bounds = array<i64: 2, 2>, scalar_prefetch = 0 : i64, scratch_operands = 2 : i64, tpu.core_type = #tpu.core_type<tc>, window_params = [{transform_indices = @transform_0, window_bounds = array<i64: 1, 64, 128>}, {transform_indices = @transform_1, window_bounds = array<i64: 128, 1>}, {pipeline_mode = #tpu.pipeline_mode<synchronous>, transform_indices = @transform_2, window_bounds = array<i64: 32, 64>}, {pipeline_mode = #tpu.pipeline_mode<synchronous>, transform_indices = @transform_3, window_bounds = array<i64: 32, 32>}, {pipeline_mode = #tpu.pipeline_mode<synchronous>, transform_indices = @transform_4, window_bounds = array<i64: 32, 64>}, {pipeline_mode = #tpu.pipeline_mode<synchronous>, transform_indices = @transform_5, window_bounds = array<i64: 32, 5>}, {pipeline_mode = #tpu.pipeline_mode<synchronous>, transform_indices = @transform_6, window_bounds = array<i64: 64, 3>}, {transform_indices = @transform_7, window_bounds = array<i64: 1, 64, 1>}]} {
    %c0_i32 = arith.constant 0 : i32
    %0 = arith.cmpi eq, %arg1, %c0_i32 : i32
    %1 = arith.extui %0 : i1 to i32
    %c0_i32_0 = arith.constant 0 : i32
    %2 = arith.cmpi ne, %1, %c0_i32_0 : i32
    scf.if %2 {
      %cst_31 = arith.constant 0.000000e+00 : f32
      %66 = vector.broadcast %cst_31 : f32 to vector<32x1xf32>
      %c0_32 = arith.constant 0 : index
      %c0_33 = arith.constant 0 : index
      %67 = vector.load %arg10[%c0_32, %c0_33] : memref<32x1xf32, #tpu.memory_space<vmem>>, vector<32x1xf32>
      tpu.vector_store %arg10[%c0_32, %c0_33], %66 {strides = array<i32>} : memref<32x1xf32, #tpu.memory_space<vmem>>, vector<32x1xf32>,
      %cst_34 = arith.constant 0.000000e+00 : f32
      %68 = vector.broadcast %cst_34 : f32 to vector<64x1xf32>
      %c0_35 = arith.constant 0 : index
      %c0_36 = arith.constant 0 : index
      %69 = vector.load %arg11[%c0_35, %c0_36] : memref<64x1xf32, #tpu.memory_space<vmem>>, vector<64x1xf32>
      tpu.vector_store %arg11[%c0_35, %c0_36], %68 {strides = array<i32>} : memref<64x1xf32, #tpu.memory_space<vmem>>, vector<64x1xf32>,
    } else {
    }
    %c0 = arith.constant 0 : index
    %c0_1 = arith.constant 0 : index
    %c0_2 = arith.constant 0 : index
    %3 = vector.load %arg2[%c0, %c0_1, %c0_2] : memref<1x64x128xf32, #tpu.memory_space<vmem>>, vector<1x64x128xf32>
    %4 = vector.shape_cast %3 : vector<1x64x128xf32> to vector<64x128xf32>
    %c0_3 = arith.constant 0 : index
    %c0_4 = arith.constant 0 : index
    %5 = vector.load %arg4[%c0_3, %c0_4] : memref<32x64xf32, #tpu.memory_space<vmem>>, vector<32x64xf32>
    %cst = arith.constant dense<0.000000e+00> : vector<32x128xf32>
    %6 = tpu.matmul %5, %4, %cst {dimension_numbers = #tpu.dot_dimension_numbers<[1], [0], [0], [1], [0, 0, 1, 1], [], []>} : vector<32x64xf32>, vector<64x128xf32>, vector<32x128xf32> -> vector<32x128xf32>
    %c0_5 = arith.constant 0 : index
    %c0_6 = arith.constant 0 : index
    %7 = vector.load %arg7[%c0_5, %c0_6] : memref<32x5xf32, #tpu.memory_space<vmem>>, vector<32x1xf32>
    %8 = vector.broadcast %7 : vector<32x1xf32> to vector<32x128xf32>
    %9 = arith.addf %6, %8 : vector<32x128xf32>
    %c0_7 = arith.constant 0 : index
    %c1 = arith.constant 1 : index
    %10 = vector.load %arg7[%c0_7, %c1] : memref<32x5xf32, #tpu.memory_space<vmem>>, vector<32x1xf32>
    %c0_8 = arith.constant 0 : index
    %c2 = arith.constant 2 : index
    %11 = vector.load %arg7[%c0_8, %c2] : memref<32x5xf32, #tpu.memory_space<vmem>>, vector<32x1xf32>
    %cst_9 = arith.constant dense<0.000000e+00> : vector<128xf32>
    %12 = vector.multi_reduction <add>, %9, %cst_9 [0] : vector<32x128xf32> to vector<128xf32>
    %13 = vector.shape_cast %12 : vector<128xf32> to vector<1x128xf32>
    %14 = arith.mulf %9, %9 : vector<32x128xf32>
    %cst_10 = arith.constant dense<0.000000e+00> : vector<128xf32>
    %15 = vector.multi_reduction <add>, %14, %cst_10 [0] : vector<32x128xf32> to vector<128xf32>
    %16 = vector.shape_cast %15 : vector<128xf32> to vector<1x128xf32>
    %cst_11 = arith.constant 3.125000e-02 : f32
    %17 = vector.broadcast %cst_11 : f32 to vector<1x128xf32>
    %18 = arith.mulf %13, %17 : vector<1x128xf32>
    %cst_12 = arith.constant 3.125000e-02 : f32
    %19 = vector.broadcast %cst_12 : f32 to vector<1x128xf32>
    %20 = arith.mulf %16, %19 : vector<1x128xf32>
    %21 = arith.mulf %18, %18 : vector<1x128xf32>
    %22 = arith.subf %20, %21 : vector<1x128xf32>
    %cst_13 = arith.constant 0.000000e+00 : f32
    %23 = vector.broadcast %cst_13 : f32 to vector<1x128xf32>
    %24 = arith.maximumf %22, %23 : vector<1x128xf32>
    %25 = vector.broadcast %18 : vector<1x128xf32> to vector<32x128xf32>
    %26 = arith.subf %9, %25 : vector<32x128xf32>
    %cst_14 = arith.constant 9.99999974E-6 : f32
    %27 = vector.broadcast %cst_14 : f32 to vector<1x128xf32>
    %28 = arith.addf %24, %27 : vector<1x128xf32>
    %29 = math.rsqrt %28 : vector<1x128xf32>
    %30 = vector.broadcast %29 : vector<1x128xf32> to vector<32x128xf32>
    %31 = arith.mulf %26, %30 : vector<32x128xf32>
    %32 = vector.broadcast %10 : vector<32x1xf32> to vector<32x128xf32>
    %33 = arith.mulf %31, %32 : vector<32x128xf32>
    %34 = vector.broadcast %11 : vector<32x1xf32> to vector<32x128xf32>
    %35 = arith.addf %33, %34 : vector<32x128xf32>
    %cst_15 = arith.constant 5.000000e-01 : f32
    %36 = vector.broadcast %cst_15 : f32 to vector<32x128xf32>
    %37 = arith.mulf %36, %35 : vector<32x128xf32>
    %cst_16 = arith.constant 0.707106769 : f32
    %38 = vector.broadcast %cst_16 : f32 to vector<32x128xf32>
    %39 = arith.mulf %35, %38 : vector<32x128xf32>
    %40 = math.erf %39 : vector<32x128xf32>
    %cst_17 = arith.constant 1.000000e+00 : f32
    %41 = vector.broadcast %cst_17 : f32 to vector<32x128xf32>
    %42 = arith.addf %41, %40 : vector<32x128xf32>
    %43 = arith.mulf %37, %42 : vector<32x128xf32>
    %44 = tpu.iota {dimensions = array<i32: 1>} : vector<1x128xi32>
    %c128_i32 = arith.constant 128 : i32
    %45 = arith.muli %arg1, %c128_i32 : i32
    %c225_i32 = arith.constant 225 : i32
    %46 = arith.subi %c225_i32, %45 : i32
    %47 = vector.broadcast %46 : i32 to vector<1x128xi32>
    %48 = arith.cmpi slt, %44, %47 : vector<1x128xi32>
    %49 = arith.extui %48 : vector<1x128xi1> to vector<1x128xi32>
    %50 = arith.sitofp %49 : vector<1x128xi32> to vector<1x128xf32>
    %51 = vector.broadcast %50 : vector<1x128xf32> to vector<32x128xf32>
    %52 = arith.mulf %43, %51 : vector<32x128xf32>
    %c0_18 = arith.constant 0 : index
    %c0_19 = arith.constant 0 : index
    %53 = vector.load %arg10[%c0_18, %c0_19] : memref<32x1xf32, #tpu.memory_space<vmem>>, vector<32x1xf32>
    %cst_20 = arith.constant dense<0.000000e+00> : vector<32xf32>
    %54 = vector.multi_reduction <add>, %52, %cst_20 [1] : vector<32x128xf32> to vector<32xf32>
    %55 = vector.shape_cast %54 : vector<32xf32> to vector<32x1xf32>
    %56 = arith.addf %53, %55 : vector<32x1xf32>
    %c0_21 = arith.constant 0 : index
    %c0_22 = arith.constant 0 : index
    %57 = vector.load %arg10[%c0_21, %c0_22] : memref<32x1xf32, #tpu.memory_space<vmem>>, vector<32x1xf32>
    tpu.vector_store %arg10[%c0_21, %c0_22], %56 {strides = array<i32>} : memref<32x1xf32, #tpu.memory_space<vmem>>, vector<32x1xf32>,
    %c0_23 = arith.constant 0 : index
    %c0_24 = arith.constant 0 : index
    %58 = vector.load %arg11[%c0_23, %c0_24] : memref<64x1xf32, #tpu.memory_space<vmem>>, vector<64x1xf32>
    %c0_25 = arith.constant 0 : index
    %c0_26 = arith.constant 0 : index
    %59 = vector.load %arg3[%c0_25, %c0_26] : memref<128x1xf32, #tpu.memory_space<vmem>>, vector<128x1xf32>
    %cst_27 = arith.constant dense<0.000000e+00> : vector<64x1xf32>
    %60 = tpu.matmul %4, %59, %cst_27 {dimension_numbers = #tpu.dot_dimension_numbers<[1], [0], [0], [1], [0, 0, 1, 1], [], []>} : vector<64x128xf32>, vector<128x1xf32>, vector<64x1xf32> -> vector<64x1xf32>
    %61 = arith.addf %58, %60 : vector<64x1xf32>
    %c0_28 = arith.constant 0 : index
    %c0_29 = arith.constant 0 : index
    %62 = vector.load %arg11[%c0_28, %c0_29] : memref<64x1xf32, #tpu.memory_space<vmem>>, vector<64x1xf32>
    tpu.vector_store %arg11[%c0_28, %c0_29], %61 {strides = array<i32>} : memref<64x1xf32, #tpu.memory_space<vmem>>, vector<64x1xf32>,
    %c1_i32 = arith.constant 1 : i32
    %63 = arith.cmpi eq, %arg1, %c1_i32 : i32
    %64 = arith.extui %63 : i1 to i32
    %c0_i32_30 = arith.constant 0 : i32
    %65 = arith.cmpi ne, %64, %c0_i32_30 : i32
    scf.if %65 {
      %c0_31 = arith.constant 0 : index
      %c0_32 = arith.constant 0 : index
      %66 = vector.load %arg10[%c0_31, %c0_32] : memref<32x1xf32, #tpu.memory_space<vmem>>, vector<32x1xf32>
      %cst_33 = arith.constant 0.00444444455 : f32
      %67 = vector.broadcast %cst_33 : f32 to vector<32x1xf32>
      %68 = arith.mulf %66, %67 : vector<32x1xf32>
      %c0_34 = arith.constant 0 : index
      %c0_35 = arith.constant 0 : index
      %69 = vector.load %arg5[%c0_34, %c0_35] : memref<32x32xf32, #tpu.memory_space<vmem>>, vector<32x32xf32>
      %cst_36 = arith.constant dense<0.000000e+00> : vector<32x1xf32>
      %70 = tpu.matmul %69, %68, %cst_36 {dimension_numbers = #tpu.dot_dimension_numbers<[1], [0], [0], [1], [0, 0, 1, 1], [], []>} : vector<32x32xf32>, vector<32x1xf32>, vector<32x1xf32> -> vector<32x1xf32>
      %c0_37 = arith.constant 0 : index
      %c3 = arith.constant 3 : index
      %71 = vector.load %arg7[%c0_37, %c3] : memref<32x5xf32, #tpu.memory_space<vmem>>, vector<32x1xf32>
      %72 = arith.addf %70, %71 : vector<32x1xf32>
      %c0_38 = arith.constant 0 : index
      %c0_39 = arith.constant 0 : index
      %73 = vector.load %arg11[%c0_38, %c0_39] : memref<64x1xf32, #tpu.memory_space<vmem>>, vector<64x1xf32>
      %c0_40 = arith.constant 0 : index
      %c2_41 = arith.constant 2 : index
      %74 = vector.load %arg8[%c0_40, %c2_41] : memref<64x3xf32, #tpu.memory_space<vmem>>, vector<64x1xf32>
      %75 = arith.addf %73, %74 : vector<64x1xf32>
      %c0_42 = arith.constant 0 : index
      %c0_43 = arith.constant 0 : index
      %76 = vector.load %arg8[%c0_42, %c0_43] : memref<64x3xf32, #tpu.memory_space<vmem>>, vector<64x1xf32>
      %c0_44 = arith.constant 0 : index
      %c1_45 = arith.constant 1 : index
      %77 = vector.load %arg8[%c0_44, %c1_45] : memref<64x3xf32, #tpu.memory_space<vmem>>, vector<64x1xf32>
      %cst_46 = arith.constant dense<0.000000e+00> : vector<1xf32>
      %78 = vector.multi_reduction <add>, %75, %cst_46 [0] : vector<64x1xf32> to vector<1xf32>
      %79 = vector.shape_cast %78 : vector<1xf32> to vector<1x1xf32>
      %80 = arith.mulf %75, %75 : vector<64x1xf32>
      %cst_47 = arith.constant dense<0.000000e+00> : vector<1xf32>
      %81 = vector.multi_reduction <add>, %80, %cst_47 [0] : vector<64x1xf32> to vector<1xf32>
      %82 = vector.shape_cast %81 : vector<1xf32> to vector<1x1xf32>
      %cst_48 = arith.constant 1.562500e-02 : f32
      %83 = vector.broadcast %cst_48 : f32 to vector<1x1xf32>
      %84 = arith.mulf %79, %83 : vector<1x1xf32>
      %cst_49 = arith.constant 1.562500e-02 : f32
      %85 = vector.broadcast %cst_49 : f32 to vector<1x1xf32>
      %86 = arith.mulf %82, %85 : vector<1x1xf32>
      %87 = arith.mulf %84, %84 : vector<1x1xf32>
      %88 = arith.subf %86, %87 : vector<1x1xf32>
      %cst_50 = arith.constant 0.000000e+00 : f32
      %89 = vector.broadcast %cst_50 : f32 to vector<1x1xf32>
      %90 = arith.maximumf %88, %89 : vector<1x1xf32>
      %91 = vector.broadcast %84 : vector<1x1xf32> to vector<64x1xf32>
      %92 = arith.subf %75, %91 : vector<64x1xf32>
      %cst_51 = arith.constant 9.99999974E-6 : f32
      %93 = vector.broadcast %cst_51 : f32 to vector<1x1xf32>
      %94 = arith.addf %90, %93 : vector<1x1xf32>
      %95 = math.rsqrt %94 : vector<1x1xf32>
      %96 = vector.broadcast %95 : vector<1x1xf32> to vector<64x1xf32>
      %97 = arith.mulf %92, %96 : vector<64x1xf32>
      %98 = arith.mulf %97, %76 : vector<64x1xf32>
      %99 = arith.addf %98, %77 : vector<64x1xf32>
      %cst_52 = arith.constant 5.000000e-01 : f32
      %100 = vector.broadcast %cst_52 : f32 to vector<64x1xf32>
      %101 = arith.mulf %100, %99 : vector<64x1xf32>
      %cst_53 = arith.constant 0.707106769 : f32
      %102 = vector.broadcast %cst_53 : f32 to vector<64x1xf32>
      %103 = arith.mulf %99, %102 : vector<64x1xf32>
      %104 = math.erf %103 : vector<64x1xf32>
      %cst_54 = arith.constant 1.000000e+00 : f32
      %105 = vector.broadcast %cst_54 : f32 to vector<64x1xf32>
      %106 = arith.addf %105, %104 : vector<64x1xf32>
      %107 = arith.mulf %101, %106 : vector<64x1xf32>
      %c0_55 = arith.constant 0 : index
      %c0_56 = arith.constant 0 : index
      %108 = vector.load %arg6[%c0_55, %c0_56] : memref<32x64xf32, #tpu.memory_space<vmem>>, vector<32x64xf32>
      %cst_57 = arith.constant dense<0.000000e+00> : vector<32x1xf32>
      %109 = tpu.matmul %108, %107, %cst_57 {dimension_numbers = #tpu.dot_dimension_numbers<[1], [0], [0], [1], [0, 0, 1, 1], [], []>} : vector<32x64xf32>, vector<64x1xf32>, vector<32x1xf32> -> vector<32x1xf32>
      %c0_58 = arith.constant 0 : index
      %c4 = arith.constant 4 : index
      %110 = vector.load %arg7[%c0_58, %c4] : memref<32x5xf32, #tpu.memory_space<vmem>>, vector<32x1xf32>
      %111 = arith.addf %109, %110 : vector<32x1xf32>
      %112 = vector.shape_cast %72 : vector<32x1xf32> to vector<1x32x1xf32>
      %c0_59 = arith.constant 0 : index
      %c0_60 = arith.constant 0 : index
      %c0_61 = arith.constant 0 : index
      %113 = vector.load %arg9[%c0_59, %c0_60, %c0_61] : memref<1x64x1xf32, #tpu.memory_space<vmem>>, vector<1x32x1xf32>
      tpu.vector_store %arg9[%c0_59, %c0_60, %c0_61], %112 {strides = array<i32>} : memref<1x64x1xf32, #tpu.memory_space<vmem>>, vector<1x32x1xf32>,
      %114 = vector.shape_cast %111 : vector<32x1xf32> to vector<1x32x1xf32>
      %c0_62 = arith.constant 0 : index
      %c32 = arith.constant 32 : index
      %c0_63 = arith.constant 0 : index
      %115 = vector.load %arg9[%c0_62, %c32, %c0_63] : memref<1x64x1xf32, #tpu.memory_space<vmem>>, vector<1x32x1xf32>
      tpu.vector_store %arg9[%c0_62, %c32, %c0_63], %114 {strides = array<i32>} : memref<1x64x1xf32, #tpu.memory_space<vmem>>, vector<1x32x1xf32>,
    } else {
    }
    return
  }
  func.func @transform_0(%arg0: i32, %arg1: i32) -> (i32, i32, i32) {
    %c0_i32 = arith.constant 0 : i32
    %c0_i32_0 = arith.constant 0 : i32
    return %arg0, %c0_i32, %arg1 : i32, i32, i32
  }
  func.func @transform_1(%arg0: i32, %arg1: i32) -> (i32, i32) {
    %c0_i32 = arith.constant 0 : i32
    %c0_i32_0 = arith.constant 0 : i32
    return %arg1, %c0_i32 : i32, i32
  }
  func.func @transform_2(%arg0: i32, %arg1: i32) -> (i32, i32) {
    %c0_i32 = arith.constant 0 : i32
    %c0_i32_0 = arith.constant 0 : i32
    %c0_i32_1 = arith.constant 0 : i32
    return %c0_i32, %c0_i32_0 : i32, i32
  }
  func.func @transform_3(%arg0: i32, %arg1: i32) -> (i32, i32) {
    %c0_i32 = arith.constant 0 : i32
    %c0_i32_0 = arith.constant 0 : i32
    %c0_i32_1 = arith.constant 0 : i32
    return %c0_i32, %c0_i32_0 : i32, i32
  }
  func.func @transform_4(%arg0: i32, %arg1: i32) -> (i32, i32) {
    %c0_i32 = arith.constant 0 : i32
    %c0_i32_0 = arith.constant 0 : i32
    %c0_i32_1 = arith.constant 0 : i32
    return %c0_i32, %c0_i32_0 : i32, i32
  }
  func.func @transform_5(%arg0: i32, %arg1: i32) -> (i32, i32) {
    %c0_i32 = arith.constant 0 : i32
    %c0_i32_0 = arith.constant 0 : i32
    %c0_i32_1 = arith.constant 0 : i32
    return %c0_i32, %c0_i32_0 : i32, i32
  }
  func.func @transform_6(%arg0: i32, %arg1: i32) -> (i32, i32) {
    %c0_i32 = arith.constant 0 : i32
    %c0_i32_0 = arith.constant 0 : i32
    %c0_i32_1 = arith.constant 0 : i32
    return %c0_i32, %c0_i32_0 : i32, i32
  }
  func.func @transform_7(%arg0: i32, %arg1: i32) -> (i32, i32, i32) {
    %c0_i32 = arith.constant 0 : i32
    %c0_i32_0 = arith.constant 0 : i32
    %c0_i32_1 = arith.constant 0 : i32
    return %arg0, %c0_i32, %c0_i32_0 : i32, i32, i32
  }
}

</mosaic_0001>

<llo_original>
// kernel: spatial_att_forward.1
$region0: #{spatial_att_forward.1}
  #allocation0 [shape = 'u32[]', space=smem, size = 0x4, offset = 0x4, fixed_abs, tag = 'smem constant byte address 0x4 - core index']
  #allocation1 [shape = 'u32[72,128]{1,0:T(1,128)}', space=vmem, size = 0x9000, scoped, tag = 'internal scratch']
  #allocation2 [shape = 'f32[32,1]{1,0:T(8,128)}', space=vmem, size = 0x4000, scoped, tag = 'scratch operand']
  #allocation3 [shape = 'f32[64,1]{1,0:T(8,128)}', space=vmem, size = 0x8000, scoped, tag = 'scratch operand']
  %s0 = inlined_call_operand.vmem [shape: f32[2,64,256], index: 0, kind: input, shape index: {}]
  %s1 = inlined_call_operand.vmem [shape: f32[256,1], index: 1, kind: input, shape index: {}]
  %s2 = inlined_call_operand.vmem [shape: f32[32,64], index: 2, kind: input, shape index: {}]
  %s3 = inlined_call_operand.vmem [shape: f32[32,32], index: 3, kind: input, shape index: {}]
  %s4 = inlined_call_operand.vmem [shape: f32[32,64], index: 4, kind: input, shape index: {}]
  %s5 = inlined_call_operand.vmem [shape: f32[32,5], index: 5, kind: input, shape index: {}]
  %s6 = inlined_call_operand.vmem [shape: f32[64,3], index: 6, kind: input, shape index: {}]
  %s7 = inlined_call_operand.vmem [shape: f32[2,64,1], index: 7, kind: output, shape index: {}]
  %s8 = sld [smem:[#allocation0]]
  $region107: #{spatial_att_forward.1} parent=0
    _
  %s10 = ssub.s32 1, %s8
  %s11 = scalar_select 0, %s10, %s8
  $region1: #{spatial_att_forward.1} parent=0
    #allocation4 [shape = 'u8[65536]{0}', space=vmem, size = 0x10000, scoped, tag = 'input window, operand 0']
    loop: start=0, step=1, limit=6
    $region2: #{spatial_att_forward.1} parent=1 // loop_pre_header
      _
    $region3: #{spatial_att_forward.1} parent=1 // loop_header
      %s13 = sphi 0, %s17
      %p14 = scmp.ge.s32.totalorder %s13, 6
      %s20 = sphi 0, %s32
      %s21 = sphi 0, %s28
      %s22 = sphi 0, %s20
      %s23 = sphi 0, %s21
      %s24 = sphi 0, %s22
      %s25 = sphi 0, %s23
      %s37 = sphi 0, %s39
      %s40 = sphi 0, %s37
      %s41 = sphi 0, %s40
      %s57 = sphi 0, %s41
      %s63 = sphi 0, %s65
      %s66 = sphi 0, %s63
      %s67 = sphi 0, %s66
      %s83 = sphi 0, %s67
      %s87 = sphi 0, %s87
      %s89 = sphi 0, %s87
      %s90 = sphi 0, %s89
      %s104 = sphi 0, %s90
      %s108 = sphi 0, %s108
      %s110 = sphi 0, %s108
      %s111 = sphi 0, %s110
      %s125 = sphi 0, %s111
      %s129 = sphi 0, %s129
      %s131 = sphi 0, %s129
      %s132 = sphi 0, %s131
      %s146 = sphi 0, %s132
      %s150 = sphi 0, %s150
      %s152 = sphi 0, %s150
      %s153 = sphi 0, %s152
      %s167 = sphi 0, %s153
      %s171 = sphi 0, %s171
      %s173 = sphi 0, %s171
      %s174 = sphi 0, %s173
      %s188 = sphi 0, %s174
      %s194 = sphi 0, %s196
      %s197 = sphi 0, %s194
      %s198 = sphi 0, %s197
      %s214 = sphi 0, %s198
    $region4: #{spatial_att_forward.1} parent=1 // loop_header_branch
      %16 = sbr.rel (%p14) target = $region8
    $region5: #{spatial_att_forward.1} parent=1 // loop_body
      %s18 = ssub.s32 %s13, 1
      %s19 = ssub.s32 %s13, 2
      %s26 = sadd.s32 1, %s21
      %p27 = scmp.ge.s32.totalorder %s26, 2
      %s28 = scalar_select %p27, 0, %s26
      %s29 = sadd.s32 1, %s20
      %s30 = scalar_select %p27, %s29, %s20
      %p31 = scmp.ge.s32.totalorder %s30, 2
      %s32 = scalar_select %p31, 0, %s30
      %s33 = ssub.s32 %s20, %s32
      %s34 = ssub.s32 %s21, %s28
      %s35 = sor.u32 %s33, %s34
      %p36 = scmp.eq.s32.totalorder %s35, 0
      %s38 = sadd.s32 %s37, 1
      %s39 = scalar_select %p36, %s37, %s38
      %p42 = pneg %p36
      %p43 = scmp.eq.s32.totalorder %s13, 3
      %p44 = por %p42, %p43
      %p45 = scmp.ne.s32.totalorder %s37, %s40
      %p46 = scmp.eq.s32.totalorder %s13, 0
      %p47 = por %p45, %p46
      %p48 = scmp.ne.s32.totalorder %s37, %s40
      %p49 = scmp.eq.s32.totalorder %s18, 3
      %p50 = por %p48, %p49
      %p51 = scmp.ne.s32.totalorder %s40, %s41
      %p52 = scmp.eq.s32.totalorder %s18, 0
      %p53 = por %p51, %p52
      %p54 = scmp.ne.s32.totalorder %s40, %s41
      %p55 = scmp.eq.s32.totalorder %s19, 3
      %p56 = por %p54, %p55
      %p58 = scmp.ne.s32.totalorder %s41, %s57
      %p59 = scmp.eq.s32.totalorder %s19, 0
      %p60 = por %p58, %p59
      %s61 = ssub.s32 %s21, %s28
      %p62 = scmp.eq.s32.totalorder %s61, 0
      %s64 = sadd.s32 %s63, 1
      %s65 = scalar_select %p62, %s63, %s64
      %p68 = pneg %p62
      %p69 = scmp.eq.s32.totalorder %s13, 3
      %p70 = por %p68, %p69
      %p71 = scmp.ne.s32.totalorder %s63, %s66
      %p72 = scmp.eq.s32.totalorder %s13, 0
      %p73 = por %p71, %p72
      %p74 = scmp.ne.s32.totalorder %s63, %s66
      %p75 = scmp.eq.s32.totalorder %s18, 3
      %p76 = por %p74, %p75
      %p77 = scmp.ne.s32.totalorder %s66, %s67
      %p78 = scmp.eq.s32.totalorder %s18, 0
      %p79 = por %p77, %p78
      %p80 = scmp.ne.s32.totalorder %s66, %s67
      %p81 = scmp.eq.s32.totalorder %s19, 3
      %p82 = por %p80, %p81
      %p84 = scmp.ne.s32.totalorder %s67, %s83
      %p85 = scmp.eq.s32.totalorder %s19, 0
      %p86 = por %p84, %p85
      %s88 = sadd.s32 %s87, 1
      %p91 = scmp.eq.s32.totalorder %s13, 3
      %p92 = scmp.ne.s32.totalorder %s87, %s89
      %p93 = scmp.eq.s32.totalorder %s13, 0
      %p94 = por %p92, %p93
      %p95 = scmp.ne.s32.totalorder %s87, %s89
      %p96 = scmp.eq.s32.totalorder %s18, 3
      %p97 = por %p95, %p96
      %p98 = scmp.ne.s32.totalorder %s89, %s90
      %p99 = scmp.eq.s32.totalorder %s18, 0
      %p100 = por %p98, %p99
      %p101 = scmp.ne.s32.totalorder %s89, %s90
      %p102 = scmp.eq.s32.totalorder %s19, 3
      %p103 = por %p101, %p102
      %p105 = scmp.ne.s32.totalorder %s90, %s104
      %p106 = scmp.eq.s32.totalorder %s19, 0
      %p107 = por %p105, %p106
      %s109 = sadd.s32 %s108, 1
      %p112 = scmp.eq.s32.totalorder %s13, 3
      %p113 = scmp.ne.s32.totalorder %s108, %s110
      %p114 = scmp.eq.s32.totalorder %s13, 0
      %p115 = por %p113, %p114
      %p116 = scmp.ne.s32.totalorder %s108, %s110
      %p117 = scmp.eq.s32.totalorder %s18, 3
      %p118 = por %p116, %p117
      %p119 = scmp.ne.s32.totalorder %s110, %s111
      %p120 = scmp.eq.s32.totalorder %s18, 0
      %p121 = por %p119, %p120
      %p122 = scmp.ne.s32.totalorder %s110, %s111
      %p123 = scmp.eq.s32.totalorder %s19, 3
      %p124 = por %p122, %p123
      %p126 = scmp.ne.s32.totalorder %s111, %s125
      %p127 = scmp.eq.s32.totalorder %s19, 0
      %p128 = por %p126, %p127
      %s130 = sadd.s32 %s129, 1
      %p133 = scmp.eq.s32.totalorder %s13, 3
      %p134 = scmp.ne.s32.totalorder %s129, %s131
      %p135 = scmp.eq.s32.totalorder %s13, 0
      %p136 = por %p134, %p135
      %p137 = scmp.ne.s32.totalorder %s129, %s131
      %p138 = scmp.eq.s32.totalorder %s18, 3
      %p139 = por %p137, %p138
      %p140 = scmp.ne.s32.totalorder %s131, %s132
      %p141 = scmp.eq.s32.totalorder %s18, 0
      %p142 = por %p140, %p141
      %p143 = scmp.ne.s32.totalorder %s131, %s132
      %p144 = scmp.eq.s32.totalorder %s19, 3
      %p145 = por %p143, %p144
      %p147 = scmp.ne.s32.totalorder %s132, %s146
      %p148 = scmp.eq.s32.totalorder %s19, 0
      %p149 = por %p147, %p148
      %s151 = sadd.s32 %s150, 1
      %p154 = scmp.eq.s32.totalorder %s13, 3
      %p155 = scmp.ne.s32.totalorder %s150, %s152
      %p156 = scmp.eq.s32.totalorder %s13, 0
      %p157 = por %p155, %p156
      %p158 = scmp.ne.s32.totalorder %s150, %s152
      %p159 = scmp.eq.s32.totalorder %s18, 3
      %p160 = por %p158, %p159
      %p161 = scmp.ne.s32.totalorder %s152, %s153
      %p162 = scmp.eq.s32.totalorder %s18, 0
      %p163 = por %p161, %p162
      %p164 = scmp.ne.s32.totalorder %s152, %s153
      %p165 = scmp.eq.s32.totalorder %s19, 3
      %p166 = por %p164, %p165
      %p168 = scmp.ne.s32.totalorder %s153, %s167
      %p169 = scmp.eq.s32.totalorder %s19, 0
      %p170 = por %p168, %p169
      %s172 = sadd.s32 %s171, 1
      %p175 = scmp.eq.s32.totalorder %s13, 3
      %p176 = scmp.ne.s32.totalorder %s171, %s173
      %p177 = scmp.eq.s32.totalorder %s13, 0
      %p178 = por %p176, %p177
      %p179 = scmp.ne.s32.totalorder %s171, %s173
      %p180 = scmp.eq.s32.totalorder %s18, 3
      %p181 = por %p179, %p180
      %p182 = scmp.ne.s32.totalorder %s173, %s174
      %p183 = scmp.eq.s32.totalorder %s18, 0
      %p184 = por %p182, %p183
      %p185 = scmp.ne.s32.totalorder %s173, %s174
      %p186 = scmp.eq.s32.totalorder %s19, 3
      %p187 = por %p185, %p186
      %p189 = scmp.ne.s32.totalorder %s174, %s188
      %p190 = scmp.eq.s32.totalorder %s19, 0
      %p191 = por %p189, %p190
      %s192 = ssub.s32 %s20, %s32
      %p193 = scmp.eq.s32.totalorder %s192, 0
      %s195 = sadd.s32 %s194, 1
      %s196 = scalar_select %p193, %s194, %s195
      %p199 = pneg %p193
      %p200 = scmp.eq.s32.totalorder %s13, 3
      %p201 = por %p199, %p200
      %p202 = scmp.ne.s32.totalorder %s194, %s197
      %p203 = scmp.eq.s32.totalorder %s13, 0
      %p204 = por %p202, %p203
      %p205 = scmp.ne.s32.totalorder %s194, %s197
      %p206 = scmp.eq.s32.totalorder %s18, 3
      %p207 = por %p205, %p206
      %p208 = scmp.ne.s32.totalorder %s197, %s198
      %p209 = scmp.eq.s32.totalorder %s18, 0
      %p210 = por %p208, %p209
      %p211 = scmp.ne.s32.totalorder %s197, %s198
      %p212 = scmp.eq.s32.totalorder %s19, 3
      %p213 = por %p211, %p212
      %p215 = scmp.ne.s32.totalorder %s198, %s214
      %p216 = scmp.eq.s32.totalorder %s19, 0
      %p217 = por %p215, %p216
      %p218 = scmp.le.s32.totalorder 1, %s13
      %p219 = scmp.lt.s32.totalorder %s13, 5
      %p220 = pnand %p218, %p219
      %p221 = pneg %p220
      // Predicated region
      $region9: #{spatial_att_forward.1} parent=5 // pred_check
        _
      $region10: #{spatial_att_forward.1} parent=5 // pred_check_branch
        %223 = sbr.rel (%p220) target = $region12
      $region11: #{spatial_att_forward.1} parent=5 // pred_region
        %s224 = ssub.s32 %s13, 1
        // Predicated region
        $region13: #{spatial_att_forward.1} parent=11 // pred_check
          %p225 = pneg %p100
        $region14: #{spatial_att_forward.1} parent=11 // pred_check_branch
          %227 = sbr.rel (%p225) target = $region16
        $region15: #{spatial_att_forward.1} parent=11 // pred_region
          _
        $region16: #{spatial_att_forward.1} parent=11 // pred_fallthru
          _
        // Predicated region
        $region17: #{spatial_att_forward.1} parent=11 // pred_check
          %p228 = pneg %p121
        $region18: #{spatial_att_forward.1} parent=11 // pred_check_branch
          %230 = sbr.rel (%p228) target = $region20
        $region19: #{spatial_att_forward.1} parent=11 // pred_region
          _
        $region20: #{spatial_att_forward.1} parent=11 // pred_fallthru
          _
        // Predicated region
        $region21: #{spatial_att_forward.1} parent=11 // pred_check
          %p231 = pneg %p142
        $region22: #{spatial_att_forward.1} parent=11 // pred_check_branch
          %233 = sbr.rel (%p231) target = $region24
        $region23: #{spatial_att_forward.1} parent=11 // pred_region
          _
        $region24: #{spatial_att_forward.1} parent=11 // pred_fallthru
          _
        // Predicated region
        $region25: #{spatial_att_forward.1} parent=11 // pred_check
          %p234 = pneg %p163
        $region26: #{spatial_att_forward.1} parent=11 // pred_check_branch
          %236 = sbr.rel (%p234) target = $region28
        $region27: #{spatial_att_forward.1} parent=11 // pred_region
          _
        $region28: #{spatial_att_forward.1} parent=11 // pred_fallthru
          _
        // Predicated region
        $region29: #{spatial_att_forward.1} parent=11 // pred_check
          %p237 = pneg %p184
        $region30: #{spatial_att_forward.1} parent=11 // pred_check_branch
          %239 = sbr.rel (%p237) target = $region32
        $region31: #{spatial_att_forward.1} parent=11 // pred_region
          _
        $region32: #{spatial_att_forward.1} parent=11 // pred_fallthru
          _
      $region12: #{spatial_att_forward.1} parent=5 // pred_fallthru
        _
      %p240 = scmp.lt.s32.totalorder %s13, 4
      // Predicated region
      $region33: #{spatial_att_forward.1} parent=5 // pred_check
        %p241 = pneg %p240
      $region34: #{spatial_att_forward.1} parent=5 // pred_check_branch
        %243 = sbr.rel (%p241) target = $region36
      $region35: #{spatial_att_forward.1} parent=5 // pred_region
        // Predicated region
        $region37: #{spatial_att_forward.1} parent=35 // pred_check
          %p244 = pneg %p47
        $region38: #{spatial_att_forward.1} parent=35 // pred_check_branch
          %246 = sbr.rel (%p244) target = $region40
        $region39: #{spatial_att_forward.1} parent=35 // pred_region
          %s247 = sand.u32 %s37, 1
          %s248 = sand.u32 %s37, 1
          %s249 = smul.addr %s248, 64
          %s250 = scalar_lea.vmem [#allocation4], %s249
          %s251 = smul.addr %s20, 16
          %s252 = sadd.s32 %s21, %s251
          %s253 = smul.addr %s252, 8
          %s254 = scalar_lea.vmem %s0, %s253
          // Predicated region
          $region41: #{spatial_att_forward.1} parent=39 // pred_check
            _
          $region42: #{spatial_att_forward.1} parent=39 // pred_check_branch
            %256 = sbr.rel (0) target = $region44
          $region43: #{spatial_att_forward.1} parent=39 // pred_region
            // Predicated region
            $region45: #{spatial_att_forward.1} parent=43 // pred_check
              _
            $region46: #{spatial_att_forward.1} parent=43 // pred_check_branch
              %258 = sbr.rel (0) target = $region48
            $region47: #{spatial_att_forward.1} parent=43 // pred_region
              // Predicated region
              $region60: #{spatial_att_forward.1} parent=47 // pred_check
                _
              $region61: #{spatial_att_forward.1} parent=47 // pred_check_branch
                %288 = sbr.rel (0) target = $region63
              $region62: #{spatial_att_forward.1} parent=47 // pred_region
                loop: start=0, step=1, limit=1
                $region64: #{spatial_att_forward.1} parent=62 // loop_pre_header
                  _
                $region65: #{spatial_att_forward.1} parent=62 // loop_header
                  %s290 = sphi 0, %s294
                  %p291 = scmp.ge.s32.totalorder %s290, 1
                  %s295 = sphi %s254, %s254
                  %s296 = sphi %s250, %s250
                $region66: #{spatial_att_forward.1} parent=62 // loop_header_branch
                  %293 = sbr.rel (%p291) target = $region70
                $region67: #{spatial_att_forward.1} parent=62 // loop_body
                  %v297 = vld [vmem:[%s295] sm:$0xff]
                  %298 = vst [vmem:[%s296] sm:$0xff] %v297
                  %v299 = vld [vmem:[%s295 + $0x10] sm:$0xff]
                  %300 = vst [vmem:[%s296 + $0x8] sm:$0xff] %v299
                  %v301 = vld [vmem:[%s295 + $0x20] sm:$0xff]
                  %302 = vst [vmem:[%s296 + $0x10] sm:$0xff] %v301
                  %v303 = vld [vmem:[%s295 + $0x30] sm:$0xff]
                  %304 = vst [vmem:[%s296 + $0x18] sm:$0xff] %v303
                  %v305 = vld [vmem:[%s295 + $0x40] sm:$0xff]
                  %306 = vst [vmem:[%s296 + $0x20] sm:$0xff] %v305
                  %v307 = vld [vmem:[%s295 + $0x50] sm:$0xff]
                  %308 = vst [vmem:[%s296 + $0x28] sm:$0xff] %v307
                  %v309 = vld [vmem:[%s295 + $0x60] sm:$0xff]
                  %310 = vst [vmem:[%s296 + $0x30] sm:$0xff] %v309
                  %v311 = vld [vmem:[%s295 + $0x70] sm:$0xff]
                  %312 = vst [vmem:[%s296 + $0x38] sm:$0xff] %v311
                $region68: #{spatial_att_forward.1} parent=62 // loop_footer
                  %s294 = sadd.s32 1, %s290
                $region69: #{spatial_att_forward.1} parent=62 // loop_footer_branch
                  %289 = sbr.rel target = $region65
                $region70: #{spatial_att_forward.1} parent=62 // loop_exit
                  _
              $region63: #{spatial_att_forward.1} parent=47 // pred_fallthru
                _
              // Predicated region
              $region71: #{spatial_att_forward.1} parent=47 // pred_check
                _
              $region72: #{spatial_att_forward.1} parent=47 // pred_check_branch
                %314 = sbr.rel target = $region74
              $region73: #{spatial_att_forward.1} parent=47 // pred_region
                _
              $region74: #{spatial_att_forward.1} parent=47 // pred_fallthru
                _
            $region48: #{spatial_att_forward.1} parent=43 // pred_fallthru
              _
            // Predicated region
            $region49: #{spatial_att_forward.1} parent=43 // pred_check
              _
            $region50: #{spatial_att_forward.1} parent=43 // pred_check_branch
              %260 = sbr.rel target = $region52
            $region51: #{spatial_att_forward.1} parent=43 // pred_region
              %s262 = ssub.s32 256, 1
              loop: start=0, step=1, limit=1
              $region53: #{spatial_att_forward.1} parent=51 // loop_pre_header
                _
              $region54: #{spatial_att_forward.1} parent=51 // loop_header
                %s264 = sphi 0, %s268
                %p265 = scmp.ge.s32.totalorder %s264, 1
                %s269 = sphi %s254, %s254
                %s270 = sphi %s250, %s250
              $region55: #{spatial_att_forward.1} parent=51 // loop_header_branch
                %267 = sbr.rel (%p265) target = $region59
              $region56: #{spatial_att_forward.1} parent=51 // loop_body
                %v271 = vld [vmem:[%s269] sm:%s262]
                %272 = vst [vmem:[%s270] sm:%s262] %v271
                %v273 = vld [vmem:[%s269 + $0x10] sm:%s262]
                %274 = vst [vmem:[%s270 + $0x8] sm:%s262] %v273
                %v275 = vld [vmem:[%s269 + $0x20] sm:%s262]
                %276 = vst [vmem:[%s270 + $0x10] sm:%s262] %v275
                %v277 = vld [vmem:[%s269 + $0x30] sm:%s262]
                %278 = vst [vmem:[%s270 + $0x18] sm:%s262] %v277
                %v279 = vld [vmem:[%s269 + $0x40] sm:%s262]
                %280 = vst [vmem:[%s270 + $0x20] sm:%s262] %v279
                %v281 = vld [vmem:[%s269 + $0x50] sm:%s262]
                %282 = vst [vmem:[%s270 + $0x28] sm:%s262] %v281
                %v283 = vld [vmem:[%s269 + $0x60] sm:%s262]
                %284 = vst [vmem:[%s270 + $0x30] sm:%s262] %v283
                %v285 = vld [vmem:[%s269 + $0x70] sm:%s262]
                %286 = vst [vmem:[%s270 + $0x38] sm:%s262] %v285
              $region57: #{spatial_att_forward.1} parent=51 // loop_footer
                %s268 = sadd.s32 1, %s264
              $region58: #{spatial_att_forward.1} parent=51 // loop_footer_branch
                %263 = sbr.rel target = $region54
              $region59: #{spatial_att_forward.1} parent=51 // loop_exit
                _
            $region52: #{spatial_att_forward.1} parent=43 // pred_fallthru
              _
          $region44: #{spatial_att_forward.1} parent=39 // pred_fallthru
            _
          %315 = vnop
        $region40: #{spatial_att_forward.1} parent=35 // pred_fallthru
          _
        // Predicated region
        $region75: #{spatial_att_forward.1} parent=35 // pred_check
          %p316 = pneg %p73
        $region76: #{spatial_att_forward.1} parent=35 // pred_check_branch
          %318 = sbr.rel (%p316) target = $region78
        $region77: #{spatial_att_forward.1} parent=35 // pred_region
          %s319 = smul.u32 16, %s21
          %p320 = scmp.lt.s32.totalorder %s319, 31
          %s321 = scalar_select %p320, %s319, 31
          %s322 = smul.addr %s321, 8
          %s323 = scalar_lea.vmem %s1, %s322
          %s324 = smul.u32 16, %s21
        $region78: #{spatial_att_forward.1} parent=35 // pred_fallthru
          _
      $region36: #{spatial_att_forward.1} parent=5 // pred_fallthru
        _
      %p325 = scmp.le.s32.totalorder 1, %s13
      %p326 = scmp.lt.s32.totalorder %s13, 5
      %p327 = pnand %p325, %p326
      %p328 = pneg %p327
      // Predicated region
      $region79: #{spatial_att_forward.1} parent=5 // pred_check
        _
      $region80: #{spatial_att_forward.1} parent=5 // pred_check_branch
        %330 = sbr.rel (%p327) target = $region82
      $region81: #{spatial_att_forward.1} parent=5 // pred_region
        %s331 = ssub.s32 %s13, 1
        %s332 = sand.u32 %s40, 1
        %s333 = sand.u32 %s40, 1
        %s334 = smul.addr %s333, 64
        %s335 = scalar_lea.vmem [#allocation4], %s334
        // Predicated region
        $region83: #{spatial_att_forward.1} parent=81 // pred_check
          %p336 = pneg %p53
        $region84: #{spatial_att_forward.1} parent=81 // pred_check_branch
          %338 = sbr.rel (%p336) target = $region86
        $region85: #{spatial_att_forward.1} parent=81 // pred_region
          _
        $region86: #{spatial_att_forward.1} parent=81 // pred_fallthru
          _
        %s339 = sand.u32 %s40, 1
        %s340 = sand.u32 %s40, 1
        %s341 = smul.addr %s340, 64
        %s342 = scalar_lea.vmem [#allocation4], %s341
        %p343 = pneg %p53
        %p344 = pneg %p50
        %s345 = smul.u32 16, %s23
        %p346 = scmp.lt.s32.totalorder %s345, 31
        %s347 = scalar_select %p346, %s345, 31
        %s348 = smul.addr %s347, 8
        %s349 = scalar_lea.vmem %s1, %s348
        %p350 = pneg %p79
        %p351 = pneg %p76
        %p352 = pneg %p100
        %p353 = pneg %p97
        %p354 = pneg %p121
        %p355 = pneg %p118
        %p356 = pneg %p142
        %p357 = pneg %p139
        %p358 = pneg %p163
        %p359 = pneg %p160
        %p360 = pneg %p184
        %p361 = pneg %p181
        %p362 = pneg %p210
        %p363 = pneg %p207
        %p364 = scmp.lt.s32.totalorder %s22, 1
        %s365 = scalar_select %p364, %s22, 1
        %s366 = smul.addr %s365, 8
        %s367 = smul.addr %s366, 8
        %s368 = scalar_lea.vmem %s7, %s367
        %s369 = smul.u32 16, %s23
        %p370 = scmp.lt.s32.totalorder %s369, 31
        %s371 = scalar_select %p370, %s369, 31
        %s372 = smul.addr %s371, 8
        %s373 = scalar_lea.vmem %s1, %s372
        %s374 = smul.u32 16, %s23
        %p375 = scmp.lt.s32.totalorder %s22, 1
        %s376 = scalar_select %p375, %s22, 1
        %s377 = smul.addr %s376, 8
        %s378 = smul.addr %s377, 8
        %s379 = scalar_lea.vmem %s7, %s378
        %p380 = scmp.eq.s32.totalorder %s23, 0
        // Predicated region
        $region87: #{spatial_att_forward.1} parent=81 // pred_check
          %p381 = pneg %p380
        $region88: #{spatial_att_forward.1} parent=81 // pred_check_branch
          %383 = sbr.rel (%p381) target = $region90
        $region89: #{spatial_att_forward.1} parent=81 // pred_region
          %vm384 = vcmask 7168
          %385 = vst.msk [vmem:[#allocation2] sm:$0xff] %vm384, 0.0
          %386 = vst.msk [vmem:[#allocation2 + $0x8] sm:$0xff] %vm384, 0.0
          %387 = vst.msk [vmem:[#allocation2 + $0x10] sm:$0xff] %vm384, 0.0
          %388 = vst.msk [vmem:[#allocation2 + $0x18] sm:$0xff] %vm384, 0.0
          %389 = vst.msk [vmem:[#allocation3] sm:$0xff] %vm384, 0.0
          %390 = vst.msk [vmem:[#allocation3 + $0x8] sm:$0xff] %vm384, 0.0
          %391 = vst.msk [vmem:[#allocation3 + $0x10] sm:$0xff] %vm384, 0.0
          %392 = vst.msk [vmem:[#allocation3 + $0x18] sm:$0xff] %vm384, 0.0
          %393 = vst.msk [vmem:[#allocation3 + $0x20] sm:$0xff] %vm384, 0.0
          %394 = vst.msk [vmem:[#allocation3 + $0x28] sm:$0xff] %vm384, 0.0
          %395 = vst.msk [vmem:[#allocation3 + $0x30] sm:$0xff] %vm384, 0.0
          %396 = vst.msk [vmem:[#allocation3 + $0x38] sm:$0xff] %vm384, 0.0
        $region90: #{spatial_att_forward.1} parent=81 // pred_fallthru
          _
        %v397 = vld [vmem:[%s335] sm:$0xff]
        %v398 = vld [vmem:[%s335 + $0x8] sm:$0xff]
        %v399 = vld [vmem:[%s335 + $0x10] sm:$0xff]
        %v400 = vld [vmem:[%s335 + $0x18] sm:$0xff]
        %v401 = vld [vmem:[%s335 + $0x20] sm:$0xff]
        %v402 = vld [vmem:[%s335 + $0x28] sm:$0xff]
        %v403 = vld [vmem:[%s335 + $0x30] sm:$0xff]
        %v404 = vld [vmem:[%s335 + $0x38] sm:$0xff]
        %v405 = vld [vmem:[%s2] sm:$0xff]
        %v406 = vld [vmem:[%s2 + $0x8] sm:$0xff]
        %v407 = vld [vmem:[%s2 + $0x10] sm:$0xff]
        %v408 = vld [vmem:[%s2 + $0x18] sm:$0xff]
        %v409 = vld [vmem:[%s5] sm:$0xff]
        %v410 = vld [vmem:[%s5 + $0x8] sm:$0xff]
        %v411 = vld [vmem:[%s5 + $0x10] sm:$0xff]
        %v412 = vld [vmem:[%s5 + $0x18] sm:$0xff]
        %414 = vset.pattern.permute.xlu0 0
        %415 = vperm.xlu0 %414, %v409
        %v416 = vpop.permute.xlu0 %415
        %419 = vset.pattern.permute.xlu0 0
        %420 = vperm.xlu0 %419, %v410
        %v421 = vpop.permute.xlu0 %420
        %424 = vset.pattern.permute.xlu0 0
        %425 = vperm.xlu0 %424, %v411
        %v426 = vpop.permute.xlu0 %425
        %429 = vset.pattern.permute.xlu0 0
        %430 = vperm.xlu0 %429, %v412
        %v431 = vpop.permute.xlu0 %430
        %vm433 = vcmask 523264
        %v435 = vsel %vm433, %v405, 0
        %v438 = vsel %vm433, %v406, 0
        %v441 = vsel %vm433, %v407, 0
        %v444 = vsel %vm433, %v408, 0
        %446 = vmatpush.msra.mxu0 0.0
        %447 = vmatpush.msra.mxu0 0.0
        %448 = vmatpush.msra.mxu0 0.0
        %449 = vmatpush.msra.mxu0 0.0
        %450 = vmatpush.msra.mxu0 0.0
        %451 = vmatpush.msra.mxu0 0.0
        %452 = vmatpush.msra.mxu0 0.0
        %453 = vmatpush.msra.mxu0 0.0
        %454 = vmatpush.msra.mxu0 %v404
        %455 = vmatpush.msra.mxu0 %v403
        %456 = vmatpush.msra.mxu0 %v402
        %457 = vmatpush.msra.mxu0 %v401
        %458 = vmatpush.msra.mxu0 %v400
        %459 = vmatpush.msra.mxu0 %v399
        %460 = vmatpush.msra.mxu0 %v398
        %461 = vmatpush.msra.mxu0 %v397
        %462 = vmatmul.f32.gmra.mxu0 %v435
        %v463 = vpop.f32.mrf.mxu0
        %v464 = vadd.f32 %v416, %v463
        %465 = vmatmul.f32.gmra.mxu0 %v438
        %v466 = vpop.f32.mrf.mxu0
        %v467 = vadd.f32 %v421, %v466
        %468 = vmatmul.f32.gmra.mxu0 %v441
        %v469 = vpop.f32.mrf.mxu0
        %v470 = vadd.f32 %v426, %v469
        %471 = vmatmul.f32.gmra.mxu0 %v444
        %v472 = vpop.f32.mrf.mxu0
        %v473 = vadd.f32 %v431, %v472
        %474 = vdwg.mxu0
        %v475 = vadd.f32 %v464, %v467
        %v476 = vadd.f32 %v475, %v470
        %v477 = vadd.f32 %v476, %v473
        %v478 = vrot.slane %v477, 4
        %v479 = vadd.f32 %v477, %v478
        %v480 = vrot.slane %v479, 2
        %v481 = vadd.f32 %v479, %v480
        %v482 = vrot.slane %v481, 1
        %v483 = vadd.f32 %v481, %v482
        %v484 = vmul.f32 %v464, %v464
        %v485 = vmul.f32 %v467, %v467
        %v486 = vmul.f32 %v470, %v470
        %v487 = vmul.f32 %v473, %v473
        %v488 = vadd.f32 %v484, %v485
        %v489 = vadd.f32 %v488, %v486
        %v490 = vadd.f32 %v489, %v487
        %v491 = vrot.slane %v490, 4
        %v492 = vadd.f32 %v490, %v491
        %v493 = vrot.slane %v492, 2
        %v494 = vadd.f32 %v492, %v493
        %v495 = vrot.slane %v494, 1
        %v496 = vadd.f32 %v494, %v495
        %v497 = vmul.f32 %v483, 0.03125
        %v498 = vmul.f32 %v496, 0.03125
        %v499 = vmul.f32 %v497, %v497
        %v500 = vsub.f32 %v498, %v499
        %v501 = vmax.f32 %v500, 0.0
        %v502 = vsub.f32 %v464, %v497
        %v503 = vsub.f32 %v467, %v497
        %v504 = vsub.f32 %v470, %v497
        %v505 = vsub.f32 %v473, %v497
        %v506 = vadd.f32 %v501, 1e-05
        %v507 = vrsqrt.pop %v506
        %v508 = vmul.f32 %v507, %v506
        %v509 = vmul.f32 %v508, %v507
        %v510 = vmul.f32 0.5, %v509
        %v511 = vsub.f32 1.5, %v510
        %v512 = vmul.f32 %v507, %v511
        %vm513 = vweird.f32 %v506
        %vm514 = vweird.f32 %v507
        %vm515 = vmor %vm513, %vm514
        %v516 = vsel %vm515, %v507, %v512
        %v517 = vmul.f32 %v502, %v516
        %v518 = vmul.f32 %v503, %v516
        %v519 = vmul.f32 %v504, %v516
        %v520 = vmul.f32 %v505, %v516
        %521 = vset.pattern.permute.xlu0 1
        %522 = vperm.xlu0 %521, %v409
        %v523 = vpop.permute.xlu0 %522
        %525 = vset.pattern.permute.xlu0 1
        %526 = vperm.xlu0 %525, %v410
        %v527 = vpop.permute.xlu0 %526
        %529 = vset.pattern.permute.xlu0 1
        %530 = vperm.xlu0 %529, %v411
        %v531 = vpop.permute.xlu0 %530
        %533 = vset.pattern.permute.xlu0 1
        %534 = vperm.xlu0 %533, %v412
        %v535 = vpop.permute.xlu0 %534
        %v537 = vmul.f32 %v517, %v523
        %v538 = vmul.f32 %v518, %v527
        %v539 = vmul.f32 %v519, %v531
        %v540 = vmul.f32 %v520, %v535
        %541 = vset.pattern.permute.xlu0 2
        %542 = vperm.xlu0 %541, %v409
        %v543 = vpop.permute.xlu0 %542
        %545 = vset.pattern.permute.xlu0 2
        %546 = vperm.xlu0 %545, %v410
        %v547 = vpop.permute.xlu0 %546
        %549 = vset.pattern.permute.xlu0 2
        %550 = vperm.xlu0 %549, %v411
        %v551 = vpop.permute.xlu0 %550
        %553 = vset.pattern.permute.xlu0 2
        %554 = vperm.xlu0 %553, %v412
        %v555 = vpop.permute.xlu0 %554
        %v557 = vadd.f32 %v537, %v543
        %v558 = vadd.f32 %v538, %v547
        %v559 = vadd.f32 %v539, %v551
        %v560 = vadd.f32 %v540, %v555
        %v561 = vmul.f32 %v557, 0.5
        %v562 = vmul.f32 %v558, 0.5
        %v563 = vmul.f32 %v559, 0.5
        %v564 = vmul.f32 %v560, 0.5
        %v565 = vmul.f32 %v557, 0.70710677
        %v566 = vmul.f32 %v558, 0.70710677
        %v567 = vmul.f32 %v559, 0.70710677
        %v568 = vmul.f32 %v560, 0.70710677
        %v569 = vmul.f32 %v565, %v565
        %v570 = vmin.f32 16.0, %v569
        %v571 = vmul.f32 %v570, 2.1237322e-06
        %v572 = vadd.f32 %v571, 0.00028619796
        %v573 = vmul.f32 %v570, %v572
        %v574 = vadd.f32 %v573, 0.0036580483
        %v575 = vmul.f32 %v570, %v574
        %v576 = vadd.f32 %v575, 0.05243302
        %v577 = vmul.f32 %v570, %v576
        %v578 = vadd.f32 %v577, 0.18741608
        %v579 = vmul.f32 %v570, %v578
        %v580 = vadd.f32 %v579, 1.1283791
        %v581 = vmul.f32 %v565, %v580
        %v582 = vmul.f32 %v570, 3.8918573e-05
        %v583 = vadd.f32 %v582, 0.001143296
        %v584 = vmul.f32 %v570, %v583
        %v585 = vadd.f32 %v584, 0.014752088
        %v586 = vmul.f32 %v570, %v585
        %v587 = vadd.f32 %v586, 0.112945676
        %v588 = vmul.f32 %v570, %v587
        %v589 = vadd.f32 %v588, 0.4994258
        %v590 = vmul.f32 %v570, %v589
        %v591 = vadd.f32 %v590, 1.0
        %v592 = vrcp.pop %v591
        %v593 = vmul.f32 %v591, %v592
        %v594 = vsub.f32 1.0, %v593
        %v595 = vmul.f32 %v592, %v594
        %v596 = vadd.f32 %v592, %v595
        %vm597 = vweird.f32 %v591
        %vm598 = vweird.f32 %v592
        %vm599 = vmor %vm597, %vm598
        %v600 = vsel %vm599, %v592, %v596
        %v601 = vand.u32 2147483647, %v591
        %vm602 = vcmp.eq.f32.partialorder %v601, 8.507059e+37
        %v603 = vand.u32 %v591, 2147483648
        %v604 = vor.u32 1.1754944e-38, %v603
        %v605 = vsel %vm602, %v604, %v600
        %v606 = vmul.f32 %v581, %v605
        %v607 = vmin.f32 %v606, 1.0
        %v608 = vmax.f32 %v607, -1.0
        %v609 = vmul.f32 %v566, %v566
        %v610 = vmin.f32 16.0, %v609
        %v611 = vmul.f32 %v610, 2.1237322e-06
        %v612 = vadd.f32 %v611, 0.00028619796
        %v613 = vmul.f32 %v610, %v612
        %v614 = vadd.f32 %v613, 0.0036580483
        %v615 = vmul.f32 %v610, %v614
        %v616 = vadd.f32 %v615, 0.05243302
        %v617 = vmul.f32 %v610, %v616
        %v618 = vadd.f32 %v617, 0.18741608
        %v619 = vmul.f32 %v610, %v618
        %v620 = vadd.f32 %v619, 1.1283791
        %v621 = vmul.f32 %v566, %v620
        %v622 = vmul.f32 %v610, 3.8918573e-05
        %v623 = vadd.f32 %v622, 0.001143296
        %v624 = vmul.f32 %v610, %v623
        %v625 = vadd.f32 %v624, 0.014752088
        %v626 = vmul.f32 %v610, %v625
        %v627 = vadd.f32 %v626, 0.112945676
        %v628 = vmul.f32 %v610, %v627
        %v629 = vadd.f32 %v628, 0.4994258
        %v630 = vmul.f32 %v610, %v629
        %v631 = vadd.f32 %v630, 1.0
        %v632 = vrcp.pop %v631
        %v633 = vmul.f32 %v631, %v632
        %v634 = vsub.f32 1.0, %v633
        %v635 = vmul.f32 %v632, %v634
        %v636 = vadd.f32 %v632, %v635
        %vm637 = vweird.f32 %v631
        %vm638 = vweird.f32 %v632
        %vm639 = vmor %vm637, %vm638
        %v640 = vsel %vm639, %v632, %v636
        %v641 = vand.u32 2147483647, %v631
        %vm642 = vcmp.eq.f32.partialorder %v641, 8.507059e+37
        %v643 = vand.u32 %v631, 2147483648
        %v644 = vor.u32 1.1754944e-38, %v643
        %v645 = vsel %vm642, %v644, %v640
        %v646 = vmul.f32 %v621, %v645
        %v647 = vmin.f32 %v646, 1.0
        %v648 = vmax.f32 %v647, -1.0
        %v649 = vmul.f32 %v567, %v567
        %v650 = vmin.f32 16.0, %v649
        %v651 = vmul.f32 %v650, 2.1237322e-06
        %v652 = vadd.f32 %v651, 0.00028619796
        %v653 = vmul.f32 %v650, %v652
        %v654 = vadd.f32 %v653, 0.0036580483
        %v655 = vmul.f32 %v650, %v654
        %v656 = vadd.f32 %v655, 0.05243302
        %v657 = vmul.f32 %v650, %v656
        %v658 = vadd.f32 %v657, 0.18741608
        %v659 = vmul.f32 %v650, %v658
        %v660 = vadd.f32 %v659, 1.1283791
        %v661 = vmul.f32 %v567, %v660
        %v662 = vmul.f32 %v650, 3.8918573e-05
        %v663 = vadd.f32 %v662, 0.001143296
        %v664 = vmul.f32 %v650, %v663
        %v665 = vadd.f32 %v664, 0.014752088
        %v666 = vmul.f32 %v650, %v665
        %v667 = vadd.f32 %v666, 0.112945676
        %v668 = vmul.f32 %v650, %v667
        %v669 = vadd.f32 %v668, 0.4994258
        %v670 = vmul.f32 %v650, %v669
        %v671 = vadd.f32 %v670, 1.0
        %v672 = vrcp.pop %v671
        %v673 = vmul.f32 %v671, %v672
        %v674 = vsub.f32 1.0, %v673
        %v675 = vmul.f32 %v672, %v674
        %v676 = vadd.f32 %v672, %v675
        %vm677 = vweird.f32 %v671
        %vm678 = vweird.f32 %v672
        %vm679 = vmor %vm677, %vm678
        %v680 = vsel %vm679, %v672, %v676
        %v681 = vand.u32 2147483647, %v671
        %vm682 = vcmp.eq.f32.partialorder %v681, 8.507059e+37
        %v683 = vand.u32 %v671, 2147483648
        %v684 = vor.u32 1.1754944e-38, %v683
        %v685 = vsel %vm682, %v684, %v680
        %v686 = vmul.f32 %v661, %v685
        %v687 = vmin.f32 %v686, 1.0
        %v688 = vmax.f32 %v687, -1.0
        %v689 = vmul.f32 %v568, %v568
        %v690 = vmin.f32 16.0, %v689
        %v691 = vmul.f32 %v690, 2.1237322e-06
        %v692 = vadd.f32 %v691, 0.00028619796
        %v693 = vmul.f32 %v690, %v692
        %v694 = vadd.f32 %v693, 0.0036580483
        %v695 = vmul.f32 %v690, %v694
        %v696 = vadd.f32 %v695, 0.05243302
        %v697 = vmul.f32 %v690, %v696
        %v698 = vadd.f32 %v697, 0.18741608
        %v699 = vmul.f32 %v690, %v698
        %v700 = vadd.f32 %v699, 1.1283791
        %v701 = vmul.f32 %v568, %v700
        %v702 = vmul.f32 %v690, 3.8918573e-05
        %v703 = vadd.f32 %v702, 0.001143296
        %v704 = vmul.f32 %v690, %v703
        %v705 = vadd.f32 %v704, 0.014752088
        %v706 = vmul.f32 %v690, %v705
        %v707 = vadd.f32 %v706, 0.112945676
        %v708 = vmul.f32 %v690, %v707
        %v709 = vadd.f32 %v708, 0.4994258
        %v710 = vmul.f32 %v690, %v709
        %v711 = vadd.f32 %v710, 1.0
        %v712 = vrcp.pop %v711
        %v713 = vmul.f32 %v711, %v712
        %v714 = vsub.f32 1.0, %v713
        %v715 = vmul.f32 %v712, %v714
        %v716 = vadd.f32 %v712, %v715
        %vm717 = vweird.f32 %v711
        %vm718 = vweird.f32 %v712
        %vm719 = vmor %vm717, %vm718
        %v720 = vsel %vm719, %v712, %v716
        %v721 = vand.u32 2147483647, %v711
        %vm722 = vcmp.eq.f32.partialorder %v721, 8.507059e+37
        %v723 = vand.u32 %v711, 2147483648
        %v724 = vor.u32 1.1754944e-38, %v723
        %v725 = vsel %vm722, %v724, %v720
        %v726 = vmul.f32 %v701, %v725
        %v727 = vmin.f32 %v726, 1.0
        %v728 = vmax.f32 %v727, -1.0
        %v729 = vadd.f32 %v608, 1.0
        %v730 = vadd.f32 %v648, 1.0
        %v731 = vadd.f32 %v688, 1.0
        %v732 = vadd.f32 %v728, 1.0
        %v733 = vmul.f32 %v561, %v729
        %v734 = vmul.f32 %v562, %v730
        %v735 = vmul.f32 %v563, %v731
        %v736 = vmul.f32 %v564, %v732
        %v737 = vlaneseq
        %v738 = vand.u32 %v737, 127
        %s739 = smul.u32 %s23, 128
        %s740 = ssub.s32 225, %s739
        %v741 = vstv %s740
        %vm742 = vcmp.lt.s32.totalorder %v738, %v741
        %v743 = vsel %vm742, 1, 0
        %v744 = vcvt.s32.f32 %v743
        %v745 = vmul.f32 %v733, %v744
        %v746 = vmul.f32 %v734, %v744
        %v747 = vmul.f32 %v735, %v744
        %v748 = vmul.f32 %v736, %v744
        %v749 = vld [vmem:[#allocation2] sm:$0xff]
        %v750 = vld [vmem:[#allocation2 + $0x8] sm:$0xff]
        %v751 = vld [vmem:[#allocation2 + $0x10] sm:$0xff]
        %v752 = vld [vmem:[#allocation2 + $0x18] sm:$0xff]
        %753 = vadd.xlane.f32.xlu0 %v745
        %v754 = vpop.xlane.xlu0 %753
        %755 = vadd.xlane.f32.xlu0 %v746
        %v756 = vpop.xlane.xlu0 %755
        %757 = vadd.xlane.f32.xlu0 %v747
        %v758 = vpop.xlane.xlu0 %757
        %759 = vadd.xlane.f32.xlu0 %v748
        %v760 = vpop.xlane.xlu0 %759
        %v761 = vadd.f32 %v749, %v754
        %v762 = vadd.f32 %v750, %v756
        %v763 = vadd.f32 %v751, %v758
        %v764 = vadd.f32 %v752, %v760
        %vm765 = vcmask 7168
        %766 = vst.msk [vmem:[#allocation2] sm:$0xff] %vm765, %v761
        %767 = vst.msk [vmem:[#allocation2 + $0x8] sm:$0xff] %vm765, %v762
        %768 = vst.msk [vmem:[#allocation2 + $0x10] sm:$0xff] %vm765, %v763
        %769 = vst.msk [vmem:[#allocation2 + $0x18] sm:$0xff] %vm765, %v764
        %v770 = vld [vmem:[#allocation3] sm:$0xff]
        %v771 = vld [vmem:[#allocation3 + $0x8] sm:$0xff]
        %v772 = vld [vmem:[#allocation3 + $0x10] sm:$0xff]
        %v773 = vld [vmem:[#allocation3 + $0x18] sm:$0xff]
        %v774 = vld [vmem:[#allocation3 + $0x20] sm:$0xff]
        %v775 = vld [vmem:[#allocation3 + $0x28] sm:$0xff]
        %v776 = vld [vmem:[#allocation3 + $0x30] sm:$0xff]
        %v777 = vld [vmem:[#allocation3 + $0x38] sm:$0xff]
        %v778 = vld [vmem:[%s373] sm:$0xff]
        %v779 = vld [vmem:[%s373 + $0x8] sm:$0xff]
        %v780 = vld [vmem:[%s373 + $0x10] sm:$0xff]
        %v781 = vld [vmem:[%s373 + $0x18] sm:$0xff]
        %v782 = vld [vmem:[%s373 + $0x20] sm:$0xff]
        %v783 = vld [vmem:[%s373 + $0x28] sm:$0xff]
        %v784 = vld [vmem:[%s373 + $0x30] sm:$0xff]
        %v785 = vld [vmem:[%s373 + $0x38] sm:$0xff]
        %v786 = vld [vmem:[%s373 + $0x40] sm:$0xff]
        %v787 = vld [vmem:[%s373 + $0x48] sm:$0xff]
        %v788 = vld [vmem:[%s373 + $0x50] sm:$0xff]
        %v789 = vld [vmem:[%s373 + $0x58] sm:$0xff]
        %v790 = vld [vmem:[%s373 + $0x60] sm:$0xff]
        %v791 = vld [vmem:[%s373 + $0x68] sm:$0xff]
        %v792 = vld [vmem:[%s373 + $0x70] sm:$0xff]
        %v793 = vld [vmem:[%s373 + $0x78] sm:$0xff]
        %794 = vmatpush.msra.mxu0 %v793
        %795 = vmatpush.msra.mxu0 %v792
        %796 = vmatpush.msra.mxu0 %v791
        %797 = vmatpush.msra.mxu0 %v790
        %798 = vmatpush.msra.mxu0 %v789
        %799 = vmatpush.msra.mxu0 %v788
        %800 = vmatpush.msra.mxu0 %v787
        %801 = vmatpush.msra.mxu0 %v786
        %802 = vmatpush.msra.mxu0 %v785
        %803 = vmatpush.msra.mxu0 %v784
        %804 = vmatpush.msra.mxu0 %v783
        %805 = vmatpush.msra.mxu0 %v782
        %806 = vmatpush.msra.mxu0 %v781
        %807 = vmatpush.msra.mxu0 %v780
        %808 = vmatpush.msra.mxu0 %v779
        %809 = vmatpush.msra.mxu0 %v778
        %810 = vmatmul.f32.gmra.mxu0 %v397
        %v811 = vpop.f32.mrf.mxu0
        %v812 = vadd.f32 0.0, %v811
        %813 = vmatmul.f32.gmra.mxu0 %v398
        %v814 = vpop.f32.mrf.mxu0
        %v815 = vadd.f32 0.0, %v814
        %816 = vmatmul.f32.gmra.mxu0 %v399
        %v817 = vpop.f32.mrf.mxu0
        %v818 = vadd.f32 0.0, %v817
        %819 = vmatmul.f32.gmra.mxu0 %v400
        %v820 = vpop.f32.mrf.mxu0
        %v821 = vadd.f32 0.0, %v820
        %822 = vmatmul.f32.gmra.mxu0 %v401
        %v823 = vpop.f32.mrf.mxu0
        %v824 = vadd.f32 0.0, %v823
        %825 = vmatmul.f32.gmra.mxu0 %v402
        %v826 = vpop.f32.mrf.mxu0
        %v827 = vadd.f32 0.0, %v826
        %828 = vmatmul.f32.gmra.mxu0 %v403
        %v829 = vpop.f32.mrf.mxu0
        %v830 = vadd.f32 0.0, %v829
        %831 = vmatmul.f32.gmra.mxu0 %v404
        %v832 = vpop.f32.mrf.mxu0
        %v833 = vadd.f32 0.0, %v832
        %834 = vdwg.mxu0
        %v835 = vadd.f32 %v770, %v812
        %v836 = vadd.f32 %v771, %v815
        %v837 = vadd.f32 %v772, %v818
        %v838 = vadd.f32 %v773, %v821
        %v839 = vadd.f32 %v774, %v824
        %v840 = vadd.f32 %v775, %v827
        %v841 = vadd.f32 %v776, %v830
        %v842 = vadd.f32 %v777, %v833
        %843 = vst.msk [vmem:[#allocation3] sm:$0xff] %vm765, %v835
        %844 = vst.msk [vmem:[#allocation3 + $0x8] sm:$0xff] %vm765, %v836
        %845 = vst.msk [vmem:[#allocation3 + $0x10] sm:$0xff] %vm765, %v837
        %846 = vst.msk [vmem:[#allocation3 + $0x18] sm:$0xff] %vm765, %v838
        %847 = vst.msk [vmem:[#allocation3 + $0x20] sm:$0xff] %vm765, %v839
        %848 = vst.msk [vmem:[#allocation3 + $0x28] sm:$0xff] %vm765, %v840
        %849 = vst.msk [vmem:[#allocation3 + $0x30] sm:$0xff] %vm765, %v841
        %850 = vst.msk [vmem:[#allocation3 + $0x38] sm:$0xff] %vm765, %v842
        %p851 = scmp.eq.s32.totalorder %s23, 1
        // Predicated region
        $region91: #{spatial_att_forward.1} parent=81 // pred_check
          %p852 = pneg %p851
        $region92: #{spatial_att_forward.1} parent=81 // pred_check_branch
          %854 = sbr.rel (%p852) target = $region94
        $region93: #{spatial_att_forward.1} parent=81 // pred_region
          %v855 = vld [vmem:[#allocation2] sm:$0xff]
          %v856 = vld [vmem:[#allocation2 + $0x8] sm:$0xff]
          %v857 = vld [vmem:[#allocation2 + $0x10] sm:$0xff]
          %v858 = vld [vmem:[#allocation2 + $0x18] sm:$0xff]
          %v859 = vmul.f32 %v855, 0.0044444446
          %v860 = vmul.f32 %v856, 0.0044444446
          %v861 = vmul.f32 %v857, 0.0044444446
          %v862 = vmul.f32 %v858, 0.0044444446
          %v863 = vld [vmem:[%s3] sm:$0xff]
          %v864 = vld [vmem:[%s3 + $0x8] sm:$0xff]
          %v865 = vld [vmem:[%s3 + $0x10] sm:$0xff]
          %v866 = vld [vmem:[%s3 + $0x18] sm:$0xff]
          %v867 = vld [vmem:[%s5] sm:$0xff]
          %v868 = vld [vmem:[%s5 + $0x8] sm:$0xff]
          %v869 = vld [vmem:[%s5 + $0x10] sm:$0xff]
          %v870 = vld [vmem:[%s5 + $0x18] sm:$0xff]
          %875 = vrot.lane.b32.xlu0 %v867, 125
          %v876 = vpop.permute.xlu0 %875
          %877 = vrot.lane.b32.xlu0 %v868, 125
          %v878 = vpop.permute.xlu0 %877
          %879 = vrot.lane.b32.xlu0 %v869, 125
          %v880 = vpop.permute.xlu0 %879
          %881 = vrot.lane.b32.xlu0 %v870, 125
          %v882 = vpop.permute.xlu0 %881
          %vm887 = vcmask 261120
          %v889 = vsel %vm887, %v863, 0
          %v892 = vsel %vm887, %v864, 0
          %v895 = vsel %vm887, %v865, 0
          %v898 = vsel %vm887, %v866, 0
          %900 = vmatpush.msra.mxu0 0.0
          %901 = vmatpush.msra.mxu0 0.0
          %902 = vmatpush.msra.mxu0 0.0
          %903 = vmatpush.msra.mxu0 0.0
          %904 = vmatpush.msra.mxu0 0.0
          %905 = vmatpush.msra.mxu0 0.0
          %906 = vmatpush.msra.mxu0 0.0
          %907 = vmatpush.msra.mxu0 0.0
          %908 = vmatpush.msra.mxu0 0.0
          %909 = vmatpush.msra.mxu0 0.0
          %910 = vmatpush.msra.mxu0 0.0
          %911 = vmatpush.msra.mxu0 0.0
          %912 = vmatpush.msra.mxu0 %v862
          %913 = vmatpush.msra.mxu0 %v861
          %914 = vmatpush.msra.mxu0 %v860
          %915 = vmatpush.msra.mxu0 %v859
          %916 = vmatmul.f32.gmra.mxu0 %v889
          %v917 = vpop.f32.mrf.mxu0
          %v918 = vadd.f32 %v876, %v917
          %919 = vmatmul.f32.gmra.mxu0 %v892
          %v920 = vpop.f32.mrf.mxu0
          %v921 = vadd.f32 %v878, %v920
          %922 = vmatmul.f32.gmra.mxu0 %v895
          %v923 = vpop.f32.mrf.mxu0
          %v924 = vadd.f32 %v880, %v923
          %925 = vmatmul.f32.gmra.mxu0 %v898
          %v926 = vpop.f32.mrf.mxu0
          %v927 = vadd.f32 %v882, %v926
          %928 = vdwg.mxu0
          %v929 = vld [vmem:[#allocation3] sm:$0xff]
          %v930 = vld [vmem:[#allocation3 + $0x8] sm:$0xff]
          %v931 = vld [vmem:[#allocation3 + $0x10] sm:$0xff]
          %v932 = vld [vmem:[#allocation3 + $0x18] sm:$0xff]
          %v933 = vld [vmem:[#allocation3 + $0x20] sm:$0xff]
          %v934 = vld [vmem:[#allocation3 + $0x28] sm:$0xff]
          %v935 = vld [vmem:[#allocation3 + $0x30] sm:$0xff]
          %v936 = vld [vmem:[#allocation3 + $0x38] sm:$0xff]
          %v937 = vld [vmem:[%s6] sm:$0xff]
          %v938 = vld [vmem:[%s6 + $0x8] sm:$0xff]
          %v939 = vld [vmem:[%s6 + $0x10] sm:$0xff]
          %v940 = vld [vmem:[%s6 + $0x18] sm:$0xff]
          %v941 = vld [vmem:[%s6 + $0x20] sm:$0xff]
          %v942 = vld [vmem:[%s6 + $0x28] sm:$0xff]
          %v943 = vld [vmem:[%s6 + $0x30] sm:$0xff]
          %v944 = vld [vmem:[%s6 + $0x38] sm:$0xff]
          %953 = vrot.lane.b32.xlu0 %v937, 126
          %v954 = vpop.permute.xlu0 %953
          %955 = vrot.lane.b32.xlu0 %v938, 126
          %v956 = vpop.permute.xlu0 %955
          %957 = vrot.lane.b32.xlu0 %v939, 126
          %v958 = vpop.permute.xlu0 %957
          %959 = vrot.lane.b32.xlu0 %v940, 126
          %v960 = vpop.permute.xlu0 %959
          %961 = vrot.lane.b32.xlu0 %v941, 126
          %v962 = vpop.permute.xlu0 %961
          %963 = vrot.lane.b32.xlu0 %v942, 126
          %v964 = vpop.permute.xlu0 %963
          %965 = vrot.lane.b32.xlu0 %v943, 126
          %v966 = vpop.permute.xlu0 %965
          %967 = vrot.lane.b32.xlu0 %v944, 126
          %v968 = vpop.permute.xlu0 %967
          %v977 = vadd.f32 %v929, %v954
          %v978 = vadd.f32 %v930, %v956
          %v979 = vadd.f32 %v931, %v958
          %v980 = vadd.f32 %v932, %v960
          %v981 = vadd.f32 %v933, %v962
          %v982 = vadd.f32 %v934, %v964
          %v983 = vadd.f32 %v935, %v966
          %v984 = vadd.f32 %v936, %v968
          %v985 = vsel %vm765, %v977, 0.0
          %v986 = vsel %vm765, %v978, 0.0
          %v987 = vadd.f32 %v985, %v986
          %v988 = vsel %vm765, %v979, 0.0
          %v989 = vadd.f32 %v987, %v988
          %v990 = vsel %vm765, %v980, 0.0
          %v991 = vadd.f32 %v989, %v990
          %v992 = vsel %vm765, %v981, 0.0
          %v993 = vadd.f32 %v991, %v992
          %v994 = vsel %vm765, %v982, 0.0
          %v995 = vadd.f32 %v993, %v994
          %v996 = vsel %vm765, %v983, 0.0
          %v997 = vadd.f32 %v995, %v996
          %v998 = vsel %vm765, %v984, 0.0
          %v999 = vadd.f32 %v997, %v998
          %v1000 = vrot.slane %v999, 4
          %v1001 = vadd.f32 %v999, %v1000
          %v1002 = vrot.slane %v1001, 2
          %v1003 = vadd.f32 %v1001, %v1002
          %v1004 = vrot.slane %v1003, 1
          %v1005 = vadd.f32 %v1003, %v1004
          %v1006 = vmul.f32 %v977, %v977
          %v1007 = vmul.f32 %v978, %v978
          %v1008 = vmul.f32 %v979, %v979
          %v1009 = vmul.f32 %v980, %v980
          %v1010 = vmul.f32 %v981, %v981
          %v1011 = vmul.f32 %v982, %v982
          %v1012 = vmul.f32 %v983, %v983
          %v1013 = vmul.f32 %v984, %v984
          %v1014 = vsel %vm765, %v1006, 0.0
          %v1015 = vsel %vm765, %v1007, 0.0
          %v1016 = vadd.f32 %v1014, %v1015
          %v1017 = vsel %vm765, %v1008, 0.0
          %v1018 = vadd.f32 %v1016, %v1017
          %v1019 = vsel %vm765, %v1009, 0.0
          %v1020 = vadd.f32 %v1018, %v1019
          %v1021 = vsel %vm765, %v1010, 0.0
          %v1022 = vadd.f32 %v1020, %v1021
          %v1023 = vsel %vm765, %v1011, 0.0
          %v1024 = vadd.f32 %v1022, %v1023
          %v1025 = vsel %vm765, %v1012, 0.0
          %v1026 = vadd.f32 %v1024, %v1025
          %v1027 = vsel %vm765, %v1013, 0.0
          %v1028 = vadd.f32 %v1026, %v1027
          %v1029 = vrot.slane %v1028, 4
          %v1030 = vadd.f32 %v1028, %v1029
          %v1031 = vrot.slane %v1030, 2
          %v1032 = vadd.f32 %v1030, %v1031
          %v1033 = vrot.slane %v1032, 1
          %v1034 = vadd.f32 %v1032, %v1033
          %v1035 = vmul.f32 %v1005, 0.015625
          %v1036 = vmul.f32 %v1034, 0.015625
          %v1037 = vmul.f32 %v1035, %v1035
          %v1038 = vsub.f32 %v1036, %v1037
          %v1039 = vmax.f32 %v1038, 0.0
          %v1040 = vsub.f32 %v977, %v1035
          %v1041 = vsub.f32 %v978, %v1035
          %v1042 = vsub.f32 %v979, %v1035
          %v1043 = vsub.f32 %v980, %v1035
          %v1044 = vsub.f32 %v981, %v1035
          %v1045 = vsub.f32 %v982, %v1035
          %v1046 = vsub.f32 %v983, %v1035
          %v1047 = vsub.f32 %v984, %v1035
          %v1048 = vadd.f32 %v1039, 1e-05
          %v1049 = vrsqrt.pop %v1048
          %v1050 = vmul.f32 %v1049, %v1048
          %v1051 = vmul.f32 %v1050, %v1049
          %v1052 = vmul.f32 0.5, %v1051
          %v1053 = vsub.f32 1.5, %v1052
          %v1054 = vmul.f32 %v1049, %v1053
          %vm1055 = vweird.f32 %v1048
          %vm1056 = vweird.f32 %v1049
          %vm1057 = vmor %vm1055, %vm1056
          %v1058 = vsel %vm1057, %v1049, %v1054
          %v1059 = vmul.f32 %v1040, %v1058
          %v1060 = vmul.f32 %v1041, %v1058
          %v1061 = vmul.f32 %v1042, %v1058
          %v1062 = vmul.f32 %v1043, %v1058
          %v1063 = vmul.f32 %v1044, %v1058
          %v1064 = vmul.f32 %v1045, %v1058
          %v1065 = vmul.f32 %v1046, %v1058
          %v1066 = vmul.f32 %v1047, %v1058
          %v1067 = vmul.f32 %v1059, %v937
          %v1068 = vmul.f32 %v1060, %v938
          %v1069 = vmul.f32 %v1061, %v939
          %v1070 = vmul.f32 %v1062, %v940
          %v1071 = vmul.f32 %v1063, %v941
          %v1072 = vmul.f32 %v1064, %v942
          %v1073 = vmul.f32 %v1065, %v943
          %v1074 = vmul.f32 %v1066, %v944
          %1075 = vrot.lane.b32.xlu0 %v937, 127
          %v1076 = vpop.permute.xlu0 %1075
          %1077 = vrot.lane.b32.xlu0 %v938, 127
          %v1078 = vpop.permute.xlu0 %1077
          %1079 = vrot.lane.b32.xlu0 %v939, 127
          %v1080 = vpop.permute.xlu0 %1079
          %1081 = vrot.lane.b32.xlu0 %v940, 127
          %v1082 = vpop.permute.xlu0 %1081
          %1083 = vrot.lane.b32.xlu0 %v941, 127
          %v1084 = vpop.permute.xlu0 %1083
          %1085 = vrot.lane.b32.xlu0 %v942, 127
          %v1086 = vpop.permute.xlu0 %1085
          %1087 = vrot.lane.b32.xlu0 %v943, 127
          %v1088 = vpop.permute.xlu0 %1087
          %1089 = vrot.lane.b32.xlu0 %v944, 127
          %v1090 = vpop.permute.xlu0 %1089
          %v1099 = vadd.f32 %v1067, %v1076
          %v1100 = vadd.f32 %v1068, %v1078
          %v1101 = vadd.f32 %v1069, %v1080
          %v1102 = vadd.f32 %v1070, %v1082
          %v1103 = vadd.f32 %v1071, %v1084
          %v1104 = vadd.f32 %v1072, %v1086
          %v1105 = vadd.f32 %v1073, %v1088
          %v1106 = vadd.f32 %v1074, %v1090
          %v1107 = vmul.f32 %v1099, 0.5
          %v1108 = vmul.f32 %v1100, 0.5
          %v1109 = vmul.f32 %v1101, 0.5
          %v1110 = vmul.f32 %v1102, 0.5
          %v1111 = vmul.f32 %v1103, 0.5
          %v1112 = vmul.f32 %v1104, 0.5
          %v1113 = vmul.f32 %v1105, 0.5
          %v1114 = vmul.f32 %v1106, 0.5
          %v1115 = vmul.f32 %v1099, 0.70710677
          %v1116 = vmul.f32 %v1100, 0.70710677
          %v1117 = vmul.f32 %v1101, 0.70710677
          %v1118 = vmul.f32 %v1102, 0.70710677
          %v1119 = vmul.f32 %v1103, 0.70710677
          %v1120 = vmul.f32 %v1104, 0.70710677
          %v1121 = vmul.f32 %v1105, 0.70710677
          %v1122 = vmul.f32 %v1106, 0.70710677
          %v1123 = vmul.f32 %v1115, %v1115
          %v1124 = vmin.f32 16.0, %v1123
          %v1125 = vmul.f32 %v1124, 2.1237322e-06
          %v1126 = vadd.f32 %v1125, 0.00028619796
          %v1127 = vmul.f32 %v1124, %v1126
          %v1128 = vadd.f32 %v1127, 0.0036580483
          %v1129 = vmul.f32 %v1124, %v1128
          %v1130 = vadd.f32 %v1129, 0.05243302
          %v1131 = vmul.f32 %v1124, %v1130
          %v1132 = vadd.f32 %v1131, 0.18741608
          %v1133 = vmul.f32 %v1124, %v1132
          %v1134 = vadd.f32 %v1133, 1.1283791
          %v1135 = vmul.f32 %v1115, %v1134
          %v1136 = vmul.f32 %v1124, 3.8918573e-05
          %v1137 = vadd.f32 %v1136, 0.001143296
          %v1138 = vmul.f32 %v1124, %v1137
          %v1139 = vadd.f32 %v1138, 0.014752088
          %v1140 = vmul.f32 %v1124, %v1139
          %v1141 = vadd.f32 %v1140, 0.112945676
          %v1142 = vmul.f32 %v1124, %v1141
          %v1143 = vadd.f32 %v1142, 0.4994258
          %v1144 = vmul.f32 %v1124, %v1143
          %v1145 = vadd.f32 %v1144, 1.0
          %v1146 = vrcp.pop %v1145
          %v1147 = vmul.f32 %v1145, %v1146
          %v1148 = vsub.f32 1.0, %v1147
          %v1149 = vmul.f32 %v1146, %v1148
          %v1150 = vadd.f32 %v1146, %v1149
          %vm1151 = vweird.f32 %v1145
          %vm1152 = vweird.f32 %v1146
          %vm1153 = vmor %vm1151, %vm1152
          %v1154 = vsel %vm1153, %v1146, %v1150
          %v1155 = vand.u32 2147483647, %v1145
          %vm1156 = vcmp.eq.f32.partialorder %v1155, 8.507059e+37
          %v1157 = vand.u32 %v1145, 2147483648
          %v1158 = vor.u32 1.1754944e-38, %v1157
          %v1159 = vsel %vm1156, %v1158, %v1154
          %v1160 = vmul.f32 %v1135, %v1159
          %v1161 = vmin.f32 %v1160, 1.0
          %v1162 = vmax.f32 %v1161, -1.0
          %v1163 = vmul.f32 %v1116, %v1116
          %v1164 = vmin.f32 16.0, %v1163
          %v1165 = vmul.f32 %v1164, 2.1237322e-06
          %v1166 = vadd.f32 %v1165, 0.00028619796
          %v1167 = vmul.f32 %v1164, %v1166
          %v1168 = vadd.f32 %v1167, 0.0036580483
          %v1169 = vmul.f32 %v1164, %v1168
          %v1170 = vadd.f32 %v1169, 0.05243302
          %v1171 = vmul.f32 %v1164, %v1170
          %v1172 = vadd.f32 %v1171, 0.18741608
          %v1173 = vmul.f32 %v1164, %v1172
          %v1174 = vadd.f32 %v1173, 1.1283791
          %v1175 = vmul.f32 %v1116, %v1174
          %v1176 = vmul.f32 %v1164, 3.8918573e-05
          %v1177 = vadd.f32 %v1176, 0.001143296
          %v1178 = vmul.f32 %v1164, %v1177
          %v1179 = vadd.f32 %v1178, 0.014752088
          %v1180 = vmul.f32 %v1164, %v1179
          %v1181 = vadd.f32 %v1180, 0.112945676
          %v1182 = vmul.f32 %v1164, %v1181
          %v1183 = vadd.f32 %v1182, 0.4994258
          %v1184 = vmul.f32 %v1164, %v1183
          %v1185 = vadd.f32 %v1184, 1.0
          %v1186 = vrcp.pop %v1185
          %v1187 = vmul.f32 %v1185, %v1186
          %v1188 = vsub.f32 1.0, %v1187
          %v1189 = vmul.f32 %v1186, %v1188
          %v1190 = vadd.f32 %v1186, %v1189
          %vm1191 = vweird.f32 %v1185
          %vm1192 = vweird.f32 %v1186
          %vm1193 = vmor %vm1191, %vm1192
          %v1194 = vsel %vm1193, %v1186, %v1190
          %v1195 = vand.u32 2147483647, %v1185
          %vm1196 = vcmp.eq.f32.partialorder %v1195, 8.507059e+37
          %v1197 = vand.u32 %v1185, 2147483648
          %v1198 = vor.u32 1.1754944e-38, %v1197
          %v1199 = vsel %vm1196, %v1198, %v1194
          %v1200 = vmul.f32 %v1175, %v1199
          %v1201 = vmin.f32 %v1200, 1.0
          %v1202 = vmax.f32 %v1201, -1.0
          %v1203 = vmul.f32 %v1117, %v1117
          %v1204 = vmin.f32 16.0, %v1203
          %v1205 = vmul.f32 %v1204, 2.1237322e-06
          %v1206 = vadd.f32 %v1205, 0.00028619796
          %v1207 = vmul.f32 %v1204, %v1206
          %v1208 = vadd.f32 %v1207, 0.0036580483
          %v1209 = vmul.f32 %v1204, %v1208
          %v1210 = vadd.f32 %v1209, 0.05243302
          %v1211 = vmul.f32 %v1204, %v1210
          %v1212 = vadd.f32 %v1211, 0.18741608
          %v1213 = vmul.f32 %v1204, %v1212
          %v1214 = vadd.f32 %v1213, 1.1283791
          %v1215 = vmul.f32 %v1117, %v1214
          %v1216 = vmul.f32 %v1204, 3.8918573e-05
          %v1217 = vadd.f32 %v1216, 0.001143296
          %v1218 = vmul.f32 %v1204, %v1217
          %v1219 = vadd.f32 %v1218, 0.014752088
          %v1220 = vmul.f32 %v1204, %v1219
          %v1221 = vadd.f32 %v1220, 0.112945676
          %v1222 = vmul.f32 %v1204, %v1221
          %v1223 = vadd.f32 %v1222, 0.4994258
          %v1224 = vmul.f32 %v1204, %v1223
          %v1225 = vadd.f32 %v1224, 1.0
          %v1226 = vrcp.pop %v1225
          %v1227 = vmul.f32 %v1225, %v1226
          %v1228 = vsub.f32 1.0, %v1227
          %v1229 = vmul.f32 %v1226, %v1228
          %v1230 = vadd.f32 %v1226, %v1229
          %vm1231 = vweird.f32 %v1225
          %vm1232 = vweird.f32 %v1226
          %vm1233 = vmor %vm1231, %vm1232
          %v1234 = vsel %vm1233, %v1226, %v1230
          %v1235 = vand.u32 2147483647, %v1225
          %vm1236 = vcmp.eq.f32.partialorder %v1235, 8.507059e+37
          %v1237 = vand.u32 %v1225, 2147483648
          %v1238 = vor.u32 1.1754944e-38, %v1237
          %v1239 = vsel %vm1236, %v1238, %v1234
          %v1240 = vmul.f32 %v1215, %v1239
          %v1241 = vmin.f32 %v1240, 1.0
          %v1242 = vmax.f32 %v1241, -1.0
          %v1243 = vmul.f32 %v1118, %v1118
          %v1244 = vmin.f32 16.0, %v1243
          %v1245 = vmul.f32 %v1244, 2.1237322e-06
          %v1246 = vadd.f32 %v1245, 0.00028619796
          %v1247 = vmul.f32 %v1244, %v1246
          %v1248 = vadd.f32 %v1247, 0.0036580483
          %v1249 = vmul.f32 %v1244, %v1248
          %v1250 = vadd.f32 %v1249, 0.05243302
          %v1251 = vmul.f32 %v1244, %v1250
          %v1252 = vadd.f32 %v1251, 0.18741608
          %v1253 = vmul.f32 %v1244, %v1252
          %v1254 = vadd.f32 %v1253, 1.1283791
          %v1255 = vmul.f32 %v1118, %v1254
          %v1256 = vmul.f32 %v1244, 3.8918573e-05
          %v1257 = vadd.f32 %v1256, 0.001143296
          %v1258 = vmul.f32 %v1244, %v1257
          %v1259 = vadd.f32 %v1258, 0.014752088
          %v1260 = vmul.f32 %v1244, %v1259
          %v1261 = vadd.f32 %v1260, 0.112945676
          %v1262 = vmul.f32 %v1244, %v1261
          %v1263 = vadd.f32 %v1262, 0.4994258
          %v1264 = vmul.f32 %v1244, %v1263
          %v1265 = vadd.f32 %v1264, 1.0
          %v1266 = vrcp.pop %v1265
          %v1267 = vmul.f32 %v1265, %v1266
          %v1268 = vsub.f32 1.0, %v1267
          %v1269 = vmul.f32 %v1266, %v1268
          %v1270 = vadd.f32 %v1266, %v1269
          %vm1271 = vweird.f32 %v1265
          %vm1272 = vweird.f32 %v1266
          %vm1273 = vmor %vm1271, %vm1272
          %v1274 = vsel %vm1273, %v1266, %v1270
          %v1275 = vand.u32 2147483647, %v1265
          %vm1276 = vcmp.eq.f32.partialorder %v1275, 8.507059e+37
          %v1277 = vand.u32 %v1265, 2147483648
          %v1278 = vor.u32 1.1754944e-38, %v1277
          %v1279 = vsel %vm1276, %v1278, %v1274
          %v1280 = vmul.f32 %v1255, %v1279
          %v1281 = vmin.f32 %v1280, 1.0
          %v1282 = vmax.f32 %v1281, -1.0
          %v1283 = vmul.f32 %v1119, %v1119
          %v1284 = vmin.f32 16.0, %v1283
          %v1285 = vmul.f32 %v1284, 2.1237322e-06
          %v1286 = vadd.f32 %v1285, 0.00028619796
          %v1287 = vmul.f32 %v1284, %v1286
          %v1288 = vadd.f32 %v1287, 0.0036580483
          %v1289 = vmul.f32 %v1284, %v1288
          %v1290 = vadd.f32 %v1289, 0.05243302
          %v1291 = vmul.f32 %v1284, %v1290
          %v1292 = vadd.f32 %v1291, 0.18741608
          %v1293 = vmul.f32 %v1284, %v1292
          %v1294 = vadd.f32 %v1293, 1.1283791
          %v1295 = vmul.f32 %v1119, %v1294
          %v1296 = vmul.f32 %v1284, 3.8918573e-05
          %v1297 = vadd.f32 %v1296, 0.001143296
          %v1298 = vmul.f32 %v1284, %v1297
          %v1299 = vadd.f32 %v1298, 0.014752088
          %v1300 = vmul.f32 %v1284, %v1299
          %v1301 = vadd.f32 %v1300, 0.112945676
          %v1302 = vmul.f32 %v1284, %v1301
          %v1303 = vadd.f32 %v1302, 0.4994258
          %v1304 = vmul.f32 %v1284, %v1303
          %v1305 = vadd.f32 %v1304, 1.0
          %v1306 = vrcp.pop %v1305
          %v1307 = vmul.f32 %v1305, %v1306
          %v1308 = vsub.f32 1.0, %v1307
          %v1309 = vmul.f32 %v1306, %v1308
          %v1310 = vadd.f32 %v1306, %v1309
          %vm1311 = vweird.f32 %v1305
          %vm1312 = vweird.f32 %v1306
          %vm1313 = vmor %vm1311, %vm1312
          %v1314 = vsel %vm1313, %v1306, %v1310
          %v1315 = vand.u32 2147483647, %v1305
          %vm1316 = vcmp.eq.f32.partialorder %v1315, 8.507059e+37
          %v1317 = vand.u32 %v1305, 2147483648
          %v1318 = vor.u32 1.1754944e-38, %v1317
          %v1319 = vsel %vm1316, %v1318, %v1314
          %v1320 = vmul.f32 %v1295, %v1319
          %v1321 = vmin.f32 %v1320, 1.0
          %v1322 = vmax.f32 %v1321, -1.0
          %v1323 = vmul.f32 %v1120, %v1120
          %v1324 = vmin.f32 16.0, %v1323
          %v1325 = vmul.f32 %v1324, 2.1237322e-06
          %v1326 = vadd.f32 %v1325, 0.00028619796
          %v1327 = vmul.f32 %v1324, %v1326
          %v1328 = vadd.f32 %v1327, 0.0036580483
          %v1329 = vmul.f32 %v1324, %v1328
          %v1330 = vadd.f32 %v1329, 0.05243302
          %v1331 = vmul.f32 %v1324, %v1330
          %v1332 = vadd.f32 %v1331, 0.18741608
          %v1333 = vmul.f32 %v1324, %v1332
          %v1334 = vadd.f32 %v1333, 1.1283791
          %v1335 = vmul.f32 %v1120, %v1334
          %v1336 = vmul.f32 %v1324, 3.8918573e-05
          %v1337 = vadd.f32 %v1336, 0.001143296
          %v1338 = vmul.f32 %v1324, %v1337
          %v1339 = vadd.f32 %v1338, 0.014752088
          %v1340 = vmul.f32 %v1324, %v1339
          %v1341 = vadd.f32 %v1340, 0.112945676
          %v1342 = vmul.f32 %v1324, %v1341
          %v1343 = vadd.f32 %v1342, 0.4994258
          %v1344 = vmul.f32 %v1324, %v1343
          %v1345 = vadd.f32 %v1344, 1.0
          %v1346 = vrcp.pop %v1345
          %v1347 = vmul.f32 %v1345, %v1346
          %v1348 = vsub.f32 1.0, %v1347
          %v1349 = vmul.f32 %v1346, %v1348
          %v1350 = vadd.f32 %v1346, %v1349
          %vm1351 = vweird.f32 %v1345
          %vm1352 = vweird.f32 %v1346
          %vm1353 = vmor %vm1351, %vm1352
          %v1354 = vsel %vm1353, %v1346, %v1350
          %v1355 = vand.u32 2147483647, %v1345
          %vm1356 = vcmp.eq.f32.partialorder %v1355, 8.507059e+37
          %v1357 = vand.u32 %v1345, 2147483648
          %v1358 = vor.u32 1.1754944e-38, %v1357
          %v1359 = vsel %vm1356, %v1358, %v1354
          %v1360 = vmul.f32 %v1335, %v1359
          %v1361 = vmin.f32 %v1360, 1.0
          %v1362 = vmax.f32 %v1361, -1.0
          %v1363 = vmul.f32 %v1121, %v1121
          %v1364 = vmin.f32 16.0, %v1363
          %v1365 = vmul.f32 %v1364, 2.1237322e-06
          %v1366 = vadd.f32 %v1365, 0.00028619796
          %v1367 = vmul.f32 %v1364, %v1366
          %v1368 = vadd.f32 %v1367, 0.0036580483
          %v1369 = vmul.f32 %v1364, %v1368
          %v1370 = vadd.f32 %v1369, 0.05243302
          %v1371 = vmul.f32 %v1364, %v1370
          %v1372 = vadd.f32 %v1371, 0.18741608
          %v1373 = vmul.f32 %v1364, %v1372
          %v1374 = vadd.f32 %v1373, 1.1283791
          %v1375 = vmul.f32 %v1121, %v1374
          %v1376 = vmul.f32 %v1364, 3.8918573e-05
          %v1377 = vadd.f32 %v1376, 0.001143296
          %v1378 = vmul.f32 %v1364, %v1377
          %v1379 = vadd.f32 %v1378, 0.014752088
          %v1380 = vmul.f32 %v1364, %v1379
          %v1381 = vadd.f32 %v1380, 0.112945676
          %v1382 = vmul.f32 %v1364, %v1381
          %v1383 = vadd.f32 %v1382, 0.4994258
          %v1384 = vmul.f32 %v1364, %v1383
          %v1385 = vadd.f32 %v1384, 1.0
          %v1386 = vrcp.pop %v1385
          %v1387 = vmul.f32 %v1385, %v1386
          %v1388 = vsub.f32 1.0, %v1387
          %v1389 = vmul.f32 %v1386, %v1388
          %v1390 = vadd.f32 %v1386, %v1389
          %vm1391 = vweird.f32 %v1385
          %vm1392 = vweird.f32 %v1386
          %vm1393 = vmor %vm1391, %vm1392
          %v1394 = vsel %vm1393, %v1386, %v1390
          %v1395 = vand.u32 2147483647, %v1385
          %vm1396 = vcmp.eq.f32.partialorder %v1395, 8.507059e+37
          %v1397 = vand.u32 %v1385, 2147483648
          %v1398 = vor.u32 1.1754944e-38, %v1397
          %v1399 = vsel %vm1396, %v1398, %v1394
          %v1400 = vmul.f32 %v1375, %v1399
          %v1401 = vmin.f32 %v1400, 1.0
          %v1402 = vmax.f32 %v1401, -1.0
          %v1403 = vmul.f32 %v1122, %v1122
          %v1404 = vmin.f32 16.0, %v1403
          %v1405 = vmul.f32 %v1404, 2.1237322e-06
          %v1406 = vadd.f32 %v1405, 0.00028619796
          %v1407 = vmul.f32 %v1404, %v1406
          %v1408 = vadd.f32 %v1407, 0.0036580483
          %v1409 = vmul.f32 %v1404, %v1408
          %v1410 = vadd.f32 %v1409, 0.05243302
          %v1411 = vmul.f32 %v1404, %v1410
          %v1412 = vadd.f32 %v1411, 0.18741608
          %v1413 = vmul.f32 %v1404, %v1412
          %v1414 = vadd.f32 %v1413, 1.1283791
          %v1415 = vmul.f32 %v1122, %v1414
          %v1416 = vmul.f32 %v1404, 3.8918573e-05
          %v1417 = vadd.f32 %v1416, 0.001143296
          %v1418 = vmul.f32 %v1404, %v1417
          %v1419 = vadd.f32 %v1418, 0.014752088
          %v1420 = vmul.f32 %v1404, %v1419
          %v1421 = vadd.f32 %v1420, 0.112945676
          %v1422 = vmul.f32 %v1404, %v1421
          %v1423 = vadd.f32 %v1422, 0.4994258
          %v1424 = vmul.f32 %v1404, %v1423
          %v1425 = vadd.f32 %v1424, 1.0
          %v1426 = vrcp.pop %v1425
          %v1427 = vmul.f32 %v1425, %v1426
          %v1428 = vsub.f32 1.0, %v1427
          %v1429 = vmul.f32 %v1426, %v1428
          %v1430 = vadd.f32 %v1426, %v1429
          %vm1431 = vweird.f32 %v1425
          %vm1432 = vweird.f32 %v1426
          %vm1433 = vmor %vm1431, %vm1432
          %v1434 = vsel %vm1433, %v1426, %v1430
          %v1435 = vand.u32 2147483647, %v1425
          %vm1436 = vcmp.eq.f32.partialorder %v1435, 8.507059e+37
          %v1437 = vand.u32 %v1425, 2147483648
          %v1438 = vor.u32 1.1754944e-38, %v1437
          %v1439 = vsel %vm1436, %v1438, %v1434
          %v1440 = vmul.f32 %v1415, %v1439
          %v1441 = vmin.f32 %v1440, 1.0
          %v1442 = vmax.f32 %v1441, -1.0
          %v1443 = vadd.f32 %v1162, 1.0
          %v1444 = vadd.f32 %v1202, 1.0
          %v1445 = vadd.f32 %v1242, 1.0
          %v1446 = vadd.f32 %v1282, 1.0
          %v1447 = vadd.f32 %v1322, 1.0
          %v1448 = vadd.f32 %v1362, 1.0
          %v1449 = vadd.f32 %v1402, 1.0
          %v1450 = vadd.f32 %v1442, 1.0
          %v1451 = vmul.f32 %v1107, %v1443
          %v1452 = vmul.f32 %v1108, %v1444
          %v1453 = vmul.f32 %v1109, %v1445
          %v1454 = vmul.f32 %v1110, %v1446
          %v1455 = vmul.f32 %v1111, %v1447
          %v1456 = vmul.f32 %v1112, %v1448
          %v1457 = vmul.f32 %v1113, %v1449
          %v1458 = vmul.f32 %v1114, %v1450
          %v1459 = vld [vmem:[%s4] sm:$0xff]
          %v1460 = vld [vmem:[%s4 + $0x8] sm:$0xff]
          %v1461 = vld [vmem:[%s4 + $0x10] sm:$0xff]
          %v1462 = vld [vmem:[%s4 + $0x18] sm:$0xff]
          %1463 = vrot.lane.b32.xlu0 %v867, 124
          %v1464 = vpop.permute.xlu0 %1463
          %1465 = vrot.lane.b32.xlu0 %v868, 124
          %v1466 = vpop.permute.xlu0 %1465
          %1467 = vrot.lane.b32.xlu0 %v869, 124
          %v1468 = vpop.permute.xlu0 %1467
          %1469 = vrot.lane.b32.xlu0 %v870, 124
          %v1470 = vpop.permute.xlu0 %1469
          %v1476 = vsel %vm433, %v1459, 0
          %v1479 = vsel %vm433, %v1460, 0
          %v1482 = vsel %vm433, %v1461, 0
          %v1485 = vsel %vm433, %v1462, 0
          %1487 = vmatpush.msra.mxu0 0.0
          %1488 = vmatpush.msra.mxu0 0.0
          %1489 = vmatpush.msra.mxu0 0.0
          %1490 = vmatpush.msra.mxu0 0.0
          %1491 = vmatpush.msra.mxu0 0.0
          %1492 = vmatpush.msra.mxu0 0.0
          %1493 = vmatpush.msra.mxu0 0.0
          %1494 = vmatpush.msra.mxu0 0.0
          %1495 = vmatpush.msra.mxu0 %v1458
          %1496 = vmatpush.msra.mxu0 %v1457
          %1497 = vmatpush.msra.mxu0 %v1456
          %1498 = vmatpush.msra.mxu0 %v1455
          %1499 = vmatpush.msra.mxu0 %v1454
          %1500 = vmatpush.msra.mxu0 %v1453
          %1501 = vmatpush.msra.mxu0 %v1452
          %1502 = vmatpush.msra.mxu0 %v1451
          %1503 = vmatmul.f32.gmra.mxu0 %v1476
          %v1504 = vpop.f32.mrf.mxu0
          %v1505 = vadd.f32 %v1464, %v1504
          %1506 = vmatmul.f32.gmra.mxu0 %v1479
          %v1507 = vpop.f32.mrf.mxu0
          %v1508 = vadd.f32 %v1466, %v1507
          %1509 = vmatmul.f32.gmra.mxu0 %v1482
          %v1510 = vpop.f32.mrf.mxu0
          %v1511 = vadd.f32 %v1468, %v1510
          %1512 = vmatmul.f32.gmra.mxu0 %v1485
          %v1513 = vpop.f32.mrf.mxu0
          %v1514 = vadd.f32 %v1470, %v1513
          %1515 = vdwg.mxu0
          %1516 = vst.msk [vmem:[%s379] sm:$0xff] %vm765, %v918
          %1517 = vst.msk [vmem:[%s379 + $0x8] sm:$0xff] %vm765, %v921
          %1518 = vst.msk [vmem:[%s379 + $0x10] sm:$0xff] %vm765, %v924
          %1519 = vst.msk [vmem:[%s379 + $0x18] sm:$0xff] %vm765, %v927
          %1520 = vst.msk [vmem:[%s379 + $0x20] sm:$0xff] %vm765, %v1505
          %1521 = vst.msk [vmem:[%s379 + $0x28] sm:$0xff] %vm765, %v1508
          %1522 = vst.msk [vmem:[%s379 + $0x30] sm:$0xff] %vm765, %v1511
          %1523 = vst.msk [vmem:[%s379 + $0x38] sm:$0xff] %vm765, %v1514
        $region94: #{spatial_att_forward.1} parent=81 // pred_fallthru
          _
        %p1524 = scmp.lt.s32.totalorder %s22, 1
        %s1525 = scalar_select %p1524, %s22, 1
        %s1526 = smul.addr %s1525, 8
        %s1527 = smul.addr %s1526, 8
        %s1528 = scalar_lea.vmem %s7, %s1527
        // Predicated region
        $region95: #{spatial_att_forward.1} parent=81 // pred_check
          %p1529 = pneg %p207
        $region96: #{spatial_att_forward.1} parent=81 // pred_check_branch
          %1531 = sbr.rel (%p1529) target = $region98
        $region97: #{spatial_att_forward.1} parent=81 // pred_region
          _
        $region98: #{spatial_att_forward.1} parent=81 // pred_fallthru
          _
      $region82: #{spatial_att_forward.1} parent=5 // pred_fallthru
        _
      %p1532 = scmp.le.s32.totalorder 2, %s13
      // Predicated region
      $region99: #{spatial_att_forward.1} parent=5 // pred_check
        %p1533 = pneg %p1532
      $region100: #{spatial_att_forward.1} parent=5 // pred_check_branch
        %1535 = sbr.rel (%p1533) target = $region102
      $region101: #{spatial_att_forward.1} parent=5 // pred_region
        %s1536 = ssub.s32 %s13, 2
        // Predicated region
        $region103: #{spatial_att_forward.1} parent=101 // pred_check
          %p1537 = pneg %p213
        $region104: #{spatial_att_forward.1} parent=101 // pred_check_branch
          %1539 = sbr.rel (%p1537) target = $region106
        $region105: #{spatial_att_forward.1} parent=101 // pred_region
          %p1540 = scmp.lt.s32.totalorder %s24, 1
          %s1541 = scalar_select %p1540, %s24, 1
          %s1542 = smul.addr %s1541, 8
          %s1543 = smul.addr %s1542, 8
          %s1544 = scalar_lea.vmem %s7, %s1543
        $region106: #{spatial_att_forward.1} parent=101 // pred_fallthru
          _
      $region102: #{spatial_att_forward.1} parent=5 // pred_fallthru
        _
    $region6: #{spatial_att_forward.1} parent=1 // loop_footer
      %s17 = sadd.s32 1, %s13
    $region7: #{spatial_att_forward.1} parent=1 // loop_footer_branch
      %12 = sbr.rel target = $region3
    $region8: #{spatial_att_forward.1} parent=1 // loop_exit
      _

</llo_original>
